<compile_context>
chip_gen: v5e
topology: v5e:2x2
jax: 0.10.0
libtpu: 0.0.40
codegen_flags: <defaults>
</compile_context>

<pallas_src>
import jax
import jax.numpy as jnp
from jax.experimental import pallas as pl
from jax.experimental.pallas import tpu as pltpu

# ---- model hyper-parameters: ChebConvNet(n_features=4, n_labels=1, width=32) ----
N_FEATURES = 4
N_LABELS = 1
WIDTH = 32
CONV_DEPTH = 3
LIN_DEPTH = 5
D2 = 2 * CONV_DEPTH * WIDTH          # n_intermediate2
NEG_SLOPE = 0.01                     # F.leaky_relu default slope
BN_EPS = 1e-5
CLASSIFICATION = False
EDGE_DROP_P = 0.3
NEG_BIG = jnp.float32(-3.0e38)       # max-pool sentinel (every graph has >=1 node)

_VMEM = pl.BlockSpec(memory_space=pltpu.MemorySpace.VMEM)


# --------------------------------------------------------------------------- #
# Single fused kernel: full forward pass, everything resident in VMEM.
# --------------------------------------------------------------------------- #
def fused_forward_kernel(x_ref, m_ref, segmean_ref, segneg_ref,
                         wc1_ref, b1_ref, wc2_ref, b2_ref, wc3_ref, b3_ref,
                         bn_scale_ref, bn_shift_ref,
                         lin_w_ref, lin_b_ref, out_w_ref, out_b_ref,
                         y_ref):
    m = m_ref[...]                                    # [N, N]  scaled Laplacian
    segmean = segmean_ref[...]                        # [B, N]  mask / count
    segneg = segneg_ref[...]                          # [B, N]  0 in-graph / -3e38 out
    h = x_ref[...]                                    # [N, WIDTH] (features padded)

    pooled = []
    for wc_ref, b_ref in ((wc1_ref, b1_ref), (wc2_ref, b2_ref), (wc3_ref, b3_ref)):
        # ChebConv(K=2): h @ W0 + (L_hat h) @ W1 + b, as one fused MXU matmul.
        tx1 = jnp.dot(m, h, preferred_element_type=jnp.float32)      # [N, WIDTH]
        xc = jnp.concatenate([h, tx1], axis=-1)                      # [N, 2*WIDTH]
        h = (jnp.dot(xc, wc_ref[...], preferred_element_type=jnp.float32)
             + b_ref[...])
        h = jnp.where(h > 0, h, NEG_SLOPE * h)                       # leaky_relu
        # gap: one MXU matmul with normalized segment weights.
        pooled.append(jnp.dot(segmean, h, preferred_element_type=jnp.float32))
        # gmp: additive -inf mask, single cross-sublane reduction.
        pooled.append(jnp.max(h[None, :, :] + segneg[:, :, None], axis=1))

    feat = jnp.concatenate(pooled, axis=-1)                          # [B, D2]
    # BatchNorm1d (eval): folded to scale/shift outside the kernel.
    feat = feat * bn_scale_ref[...] + bn_shift_ref[...]
    for g in range(LIN_DEPTH):
        feat = (jnp.dot(feat, lin_w_ref[g], preferred_element_type=jnp.float32)
                + lin_b_ref[g])
        feat = jnp.where(feat > 0, feat, NEG_SLOPE * feat)           # leaky_relu
        # nn.Dropout(0.3) at (g-1)%3==0 and lin_depth-1>g -> identity in eval mode.
    y = (jnp.dot(feat, out_w_ref[...], preferred_element_type=jnp.float32)
         + out_b_ref[...])
    if CLASSIFICATION:
        y = jax.nn.sigmoid(y)
    y_ref[...] = y


def fused_forward(x_pad, M, seg_mean_t, seg_neg, kp):
    num_graphs = seg_mean_t.shape[0]
    return pl.pallas_call(
        fused_forward_kernel,
        out_shape=jax.ShapeDtypeStruct((num_graphs, N_LABELS), jnp.float32),
        in_specs=[_VMEM] * 16,
        out_specs=_VMEM,
    )(x_pad, M, seg_mean_t, seg_neg,
      kp["wc"][0], kp["bc"][0], kp["wc"][1], kp["bc"][1], kp["wc"][2], kp["bc"][2],
      kp["bn_scale"], kp["bn_shift"], kp["lin_w"], kp["lin_b"],
      kp["out_w"], kp["out_b"])


# --------------------------------------------------------------------------- #
# Glue: graph construction (knn_graph + dropout_adj + sym Laplacian), params.
# --------------------------------------------------------------------------- #
def build_scaled_laplacian(x, batch, key):
    """Dense L_hat = -D^{-1/2} A D^{-1/2} after knn_graph(k=100) + dropout_adj."""
    n = x.shape[0]
    same = batch[:, None] == batch[None, :]
    not_self = ~jnp.eye(n, dtype=bool)
    adj = same & not_self                              # adj[dst, src]: complete digraph
    keep = jax.random.bernoulli(key, 1.0 - EDGE_DROP_P, (n, n))
    adj = jnp.where(adj & keep, 1.0, 0.0).astype(jnp.float32)
    deg = jnp.sum(adj, axis=0)                         # row (source/out) degree, as PyG
    dis = jnp.where(deg > 0, jax.lax.rsqrt(deg), 0.0)
    return -(dis[:, None] * dis[None, :]) * adj        # [N_dst, N_src]


def _glorot(key, shape):
    fan_in, fan_out = shape
    lim = (6.0 / (fan_in + fan_out)) ** 0.5
    return jax.random.uniform(key, shape, jnp.float32, -lim, lim)


def init_params(key):
    keys = iter(jax.random.split(key, 3 * CONV_DEPTH + 2 * LIN_DEPTH + 4))
    convs = []
    in_dim = N_FEATURES
    for _ in range(CONV_DEPTH):
        w0 = _glorot(next(keys), (in_dim, WIDTH))
        w1 = _glorot(next(keys), (in_dim, WIDTH))
        b = jax.random.uniform(next(keys), (1, WIDTH), jnp.float32, -0.1, 0.1)
        convs.append((w0, w1, b))
        in_dim = WIDTH
    lin_w = jnp.stack([_glorot(next(keys), (D2, D2)) for _ in range(LIN_DEPTH)])
    lim = 1.0 / (D2 ** 0.5)
    lin_b = jnp.stack([jax.random.uniform(next(keys), (1, D2), jnp.float32, -lim, lim)
                       for _ in range(LIN_DEPTH)])
    out_w = _glorot(next(keys), (D2, N_LABELS))
    out_b = jax.random.uniform(next(keys), (1, N_LABELS), jnp.float32, -lim, lim)
    return dict(
        convs=convs,
        bn_gamma=jnp.ones((1, D2), jnp.float32),
        bn_beta=jnp.zeros((1, D2), jnp.float32),
        bn_mean=jnp.zeros((1, D2), jnp.float32),   # running_mean (eval mode)
        bn_var=jnp.ones((1, D2), jnp.float32),     # running_var  (eval mode)
        lin_w=lin_w, lin_b=lin_b, out_w=out_w, out_b=out_b,
    )


def prepare_kernel_params(params):
    """Stack/pad weights into the layout the fused kernel consumes."""
    wc, bc = [], []
    for (w0, w1, b) in params["convs"]:
        fin = w0.shape[0]
        if fin < WIDTH:                              # first layer: pad 4 -> WIDTH rows
            pad = ((0, WIDTH - fin), (0, 0))
            w0 = jnp.pad(w0, pad)
            w1 = jnp.pad(w1, pad)
        wc.append(jnp.concatenate([w0, w1], axis=0))  # [2*WIDTH, WIDTH]
        bc.append(b)                                  # [1, WIDTH]
    bn_scale = params["bn_gamma"] * jax.lax.rsqrt(params["bn_var"] + BN_EPS)
    bn_shift = params["bn_beta"] - params["bn_mean"] * bn_scale
    return dict(wc=wc, bc=bc, bn_scale=bn_scale, bn_shift=bn_shift,
                lin_w=params["lin_w"], lin_b=params["lin_b"],
                out_w=params["out_w"], out_b=params["out_b"])


def forward(x, batch, num_graphs, params, edge_key):
    M = build_scaled_laplacian(x, batch, edge_key)
    # Transposed segment weights: [B, N] -> lane-dense node axis, matmul pooling.
    seg_mask_t = (jnp.arange(num_graphs)[:, None] == batch[None, :]).astype(jnp.float32)
    counts = jnp.sum(seg_mask_t, axis=1, keepdims=True)
    seg_mean_t = seg_mask_t / jnp.maximum(counts, 1.0)
    seg_neg = (1.0 - seg_mask_t) * NEG_BIG
    # Zero-pad node features 4 -> WIDTH so all conv layers share one weight shape.
    x_pad = jnp.pad(x, ((0, 0), (0, WIDTH - N_FEATURES)))
    kp = prepare_kernel_params(params)
    y = fused_forward(x_pad, M, seg_mean_t, seg_neg, kp)   # [B, n_labels]
    return y.reshape(-1)                                   # x.view(-1)


if __name__ == "__main__":
    key = jax.random.PRNGKey(0)
    k_x, k_edge, k_param = jax.random.split(key, 3)

    nodes_per_graph = 16
    num_graphs = 2
    n_nodes = nodes_per_graph * num_graphs

    x = jax.random.normal(k_x, (n_nodes, N_FEATURES), jnp.float32)
    batch = jnp.repeat(jnp.arange(num_graphs, dtype=jnp.int32), nodes_per_graph)

    params = init_params(k_param)
    y = forward(x, batch, num_graphs, params, k_edge)
    y = jax.block_until_ready(y)
    assert y.shape == (num_graphs * N_LABELS,)
    assert bool(jnp.all(jnp.isfinite(y)))
    print("KERNEL_OK")
</pallas_src>

<mosaic_0001>
module attributes {stable_mosaic.version = 11 : i64} {
  func.func @fused_forward_kernel(%arg0: memref<32x32xf32, #tpu.memory_space<vmem>>, %arg1: memref<32x32xf32, #tpu.memory_space<vmem>>, %arg2: memref<2x32xf32, #tpu.memory_space<vmem>>, %arg3: memref<2x32xf32, #tpu.memory_space<vmem>>, %arg4: memref<64x32xf32, #tpu.memory_space<vmem>>, %arg5: memref<1x32xf32, #tpu.memory_space<vmem>>, %arg6: memref<64x32xf32, #tpu.memory_space<vmem>>, %arg7: memref<1x32xf32, #tpu.memory_space<vmem>>, %arg8: memref<64x32xf32, #tpu.memory_space<vmem>>, %arg9: memref<1x32xf32, #tpu.memory_space<vmem>>, %arg10: memref<1x192xf32, #tpu.memory_space<vmem>>, %arg11: memref<1x192xf32, #tpu.memory_space<vmem>>, %arg12: memref<5x192x192xf32, #tpu.memory_space<vmem>>, %arg13: memref<5x1x192xf32, #tpu.memory_space<vmem>>, %arg14: memref<192x1xf32, #tpu.memory_space<vmem>>, %arg15: memref<1x1xf32, #tpu.memory_space<vmem>>, %arg16: memref<2x1xf32, #tpu.memory_space<vmem>>) attributes {dimension_semantics = [], scalar_prefetch = 0 : i64, scratch_operands = 0 : i64, tpu.core_type = #tpu.core_type<tc>} {
    %c0 = arith.constant 0 : index
    %c0_0 = arith.constant 0 : index
    %0 = vector.load %arg1[%c0, %c0_0] : memref<32x32xf32, #tpu.memory_space<vmem>>, vector<32x32xf32>
    %c0_1 = arith.constant 0 : index
    %c0_2 = arith.constant 0 : index
    %1 = vector.load %arg2[%c0_1, %c0_2] : memref<2x32xf32, #tpu.memory_space<vmem>>, vector<2x32xf32>
    %c0_3 = arith.constant 0 : index
    %c0_4 = arith.constant 0 : index
    %2 = vector.load %arg3[%c0_3, %c0_4] : memref<2x32xf32, #tpu.memory_space<vmem>>, vector<2x32xf32>
    %c0_5 = arith.constant 0 : index
    %c0_6 = arith.constant 0 : index
    %3 = vector.load %arg0[%c0_5, %c0_6] : memref<32x32xf32, #tpu.memory_space<vmem>>, vector<32x32xf32>
    %cst = arith.constant dense<0.000000e+00> : vector<32x32xf32>
    %4 = tpu.matmul %0, %3, %cst {dimension_numbers = #tpu.dot_dimension_numbers<[1], [0], [0], [1], [0, 0, 1, 1], [], []>} : vector<32x32xf32>, vector<32x32xf32>, vector<32x32xf32> -> vector<32x32xf32>
    %5 = tpu.concatenate %3, %4 in 1 : vector<32x32xf32>, vector<32x32xf32> -> vector<32x64xf32>
    %c0_7 = arith.constant 0 : index
    %c0_8 = arith.constant 0 : index
    %6 = vector.load %arg4[%c0_7, %c0_8] : memref<64x32xf32, #tpu.memory_space<vmem>>, vector<64x32xf32>
    %cst_9 = arith.constant dense<0.000000e+00> : vector<32x32xf32>
    %7 = tpu.matmul %5, %6, %cst_9 {dimension_numbers = #tpu.dot_dimension_numbers<[1], [0], [0], [1], [0, 0, 1, 1], [], []>} : vector<32x64xf32>, vector<64x32xf32>, vector<32x32xf32> -> vector<32x32xf32>
    %c0_10 = arith.constant 0 : index
    %c0_11 = arith.constant 0 : index
    %8 = vector.load %arg5[%c0_10, %c0_11] : memref<1x32xf32, #tpu.memory_space<vmem>>, vector<1x32xf32>
    %9 = vector.broadcast %8 : vector<1x32xf32> to vector<32x32xf32>
    %10 = arith.addf %7, %9 : vector<32x32xf32>
    %cst_12 = arith.constant 0.000000e+00 : f32
    %11 = vector.broadcast %cst_12 : f32 to vector<32x32xf32>
    %12 = arith.cmpf ogt, %10, %11 : vector<32x32xf32>
    %cst_13 = arith.constant 0.00999999977 : f32
    %13 = vector.broadcast %cst_13 : f32 to vector<32x32xf32>
    %14 = arith.mulf %13, %10 : vector<32x32xf32>
    %15 = arith.select %12, %10, %14 : vector<32x32xi1>, vector<32x32xf32>
    %cst_14 = arith.constant dense<0.000000e+00> : vector<2x32xf32>
    %16 = tpu.matmul %1, %15, %cst_14 {dimension_numbers = #tpu.dot_dimension_numbers<[1], [0], [0], [1], [0, 0, 1, 1], [], []>} : vector<2x32xf32>, vector<32x32xf32>, vector<2x32xf32> -> vector<2x32xf32>
    %17 = vector.shape_cast %15 : vector<32x32xf32> to vector<1x32x32xf32>
    %18 = vector.shape_cast %2 : vector<2x32xf32> to vector<2x32x1xf32>
    %19 = vector.broadcast %17 : vector<1x32x32xf32> to vector<2x32x32xf32>
    %20 = vector.broadcast %18 : vector<2x32x1xf32> to vector<2x32x32xf32>
    %21 = arith.addf %19, %20 : vector<2x32x32xf32>
    %cst_15 = arith.constant dense<0xFF800000> : vector<2x32xf32>
    %22 = vector.multi_reduction <maximumf>, %21, %cst_15 [1] : vector<2x32x32xf32> to vector<2x32xf32>
    %cst_16 = arith.constant dense<0.000000e+00> : vector<32x32xf32>
    %23 = tpu.matmul %0, %15, %cst_16 {dimension_numbers = #tpu.dot_dimension_numbers<[1], [0], [0], [1], [0, 0, 1, 1], [], []>} : vector<32x32xf32>, vector<32x32xf32>, vector<32x32xf32> -> vector<32x32xf32>
    %24 = tpu.concatenate %15, %23 in 1 : vector<32x32xf32>, vector<32x32xf32> -> vector<32x64xf32>
    %c0_17 = arith.constant 0 : index
    %c0_18 = arith.constant 0 : index
    %25 = vector.load %arg6[%c0_17, %c0_18] : memref<64x32xf32, #tpu.memory_space<vmem>>, vector<64x32xf32>
    %cst_19 = arith.constant dense<0.000000e+00> : vector<32x32xf32>
    %26 = tpu.matmul %24, %25, %cst_19 {dimension_numbers = #tpu.dot_dimension_numbers<[1], [0], [0], [1], [0, 0, 1, 1], [], []>} : vector<32x64xf32>, vector<64x32xf32>, vector<32x32xf32> -> vector<32x32xf32>
    %c0_20 = arith.constant 0 : index
    %c0_21 = arith.constant 0 : index
    %27 = vector.load %arg7[%c0_20, %c0_21] : memref<1x32xf32, #tpu.memory_space<vmem>>, vector<1x32xf32>
    %28 = vector.broadcast %27 : vector<1x32xf32> to vector<32x32xf32>
    %29 = arith.addf %26, %28 : vector<32x32xf32>
    %cst_22 = arith.constant 0.000000e+00 : f32
    %30 = vector.broadcast %cst_22 : f32 to vector<32x32xf32>
    %31 = arith.cmpf ogt, %29, %30 : vector<32x32xf32>
    %cst_23 = arith.constant 0.00999999977 : f32
    %32 = vector.broadcast %cst_23 : f32 to vector<32x32xf32>
    %33 = arith.mulf %32, %29 : vector<32x32xf32>
    %34 = arith.select %31, %29, %33 : vector<32x32xi1>, vector<32x32xf32>
    %cst_24 = arith.constant dense<0.000000e+00> : vector<2x32xf32>
    %35 = tpu.matmul %1, %34, %cst_24 {dimension_numbers = #tpu.dot_dimension_numbers<[1], [0], [0], [1], [0, 0, 1, 1], [], []>} : vector<2x32xf32>, vector<32x32xf32>, vector<2x32xf32> -> vector<2x32xf32>
    %36 = vector.shape_cast %34 : vector<32x32xf32> to vector<1x32x32xf32>
    %37 = vector.shape_cast %2 : vector<2x32xf32> to vector<2x32x1xf32>
    %38 = vector.broadcast %36 : vector<1x32x32xf32> to vector<2x32x32xf32>
    %39 = vector.broadcast %37 : vector<2x32x1xf32> to vector<2x32x32xf32>
    %40 = arith.addf %38, %39 : vector<2x32x32xf32>
    %cst_25 = arith.constant dense<0xFF800000> : vector<2x32xf32>
    %41 = vector.multi_reduction <maximumf>, %40, %cst_25 [1] : vector<2x32x32xf32> to vector<2x32xf32>
    %cst_26 = arith.constant dense<0.000000e+00> : vector<32x32xf32>
    %42 = tpu.matmul %0, %34, %cst_26 {dimension_numbers = #tpu.dot_dimension_numbers<[1], [0], [0], [1], [0, 0, 1, 1], [], []>} : vector<32x32xf32>, vector<32x32xf32>, vector<32x32xf32> -> vector<32x32xf32>
    %43 = tpu.concatenate %34, %42 in 1 : vector<32x32xf32>, vector<32x32xf32> -> vector<32x64xf32>
    %c0_27 = arith.constant 0 : index
    %c0_28 = arith.constant 0 : index
    %44 = vector.load %arg8[%c0_27, %c0_28] : memref<64x32xf32, #tpu.memory_space<vmem>>, vector<64x32xf32>
    %cst_29 = arith.constant dense<0.000000e+00> : vector<32x32xf32>
    %45 = tpu.matmul %43, %44, %cst_29 {dimension_numbers = #tpu.dot_dimension_numbers<[1], [0], [0], [1], [0, 0, 1, 1], [], []>} : vector<32x64xf32>, vector<64x32xf32>, vector<32x32xf32> -> vector<32x32xf32>
    %c0_30 = arith.constant 0 : index
    %c0_31 = arith.constant 0 : index
    %46 = vector.load %arg9[%c0_30, %c0_31] : memref<1x32xf32, #tpu.memory_space<vmem>>, vector<1x32xf32>
    %47 = vector.broadcast %46 : vector<1x32xf32> to vector<32x32xf32>
    %48 = arith.addf %45, %47 : vector<32x32xf32>
    %cst_32 = arith.constant 0.000000e+00 : f32
    %49 = vector.broadcast %cst_32 : f32 to vector<32x32xf32>
    %50 = arith.cmpf ogt, %48, %49 : vector<32x32xf32>
    %cst_33 = arith.constant 0.00999999977 : f32
    %51 = vector.broadcast %cst_33 : f32 to vector<32x32xf32>
    %52 = arith.mulf %51, %48 : vector<32x32xf32>
    %53 = arith.select %50, %48, %52 : vector<32x32xi1>, vector<32x32xf32>
    %cst_34 = arith.constant dense<0.000000e+00> : vector<2x32xf32>
    %54 = tpu.matmul %1, %53, %cst_34 {dimension_numbers = #tpu.dot_dimension_numbers<[1], [0], [0], [1], [0, 0, 1, 1], [], []>} : vector<2x32xf32>, vector<32x32xf32>, vector<2x32xf32> -> vector<2x32xf32>
    %55 = vector.shape_cast %53 : vector<32x32xf32> to vector<1x32x32xf32>
    %56 = vector.shape_cast %2 : vector<2x32xf32> to vector<2x32x1xf32>
    %57 = vector.broadcast %55 : vector<1x32x32xf32> to vector<2x32x32xf32>
    %58 = vector.broadcast %56 : vector<2x32x1xf32> to vector<2x32x32xf32>
    %59 = arith.addf %57, %58 : vector<2x32x32xf32>
    %cst_35 = arith.constant dense<0xFF800000> : vector<2x32xf32>
    %60 = vector.multi_reduction <maximumf>, %59, %cst_35 [1] : vector<2x32x32xf32> to vector<2x32xf32>
    %61 = tpu.concatenate %16, %22, %35, %41, %54, %60 in 1 : vector<2x32xf32>, vector<2x32xf32>, vector<2x32xf32>, vector<2x32xf32>, vector<2x32xf32>, vector<2x32xf32> -> vector<2x192xf32>
    %c0_36 = arith.constant 0 : index
    %c0_37 = arith.constant 0 : index
    %62 = vector.load %arg10[%c0_36, %c0_37] : memref<1x192xf32, #tpu.memory_space<vmem>>, vector<1x192xf32>
    %63 = vector.broadcast %62 : vector<1x192xf32> to vector<2x192xf32>
    %64 = arith.mulf %61, %63 : vector<2x192xf32>
    %c0_38 = arith.constant 0 : index
    %c0_39 = arith.constant 0 : index
    %65 = vector.load %arg11[%c0_38, %c0_39] : memref<1x192xf32, #tpu.memory_space<vmem>>, vector<1x192xf32>
    %66 = vector.broadcast %65 : vector<1x192xf32> to vector<2x192xf32>
    %67 = arith.addf %64, %66 : vector<2x192xf32>
    %c0_40 = arith.constant 0 : index
    %c0_41 = arith.constant 0 : index
    %c0_42 = arith.constant 0 : index
    %68 = vector.load %arg12[%c0_40, %c0_41, %c0_42] : memref<5x192x192xf32, #tpu.memory_space<vmem>>, vector<1x192x192xf32>
    %69 = vector.shape_cast %68 : vector<1x192x192xf32> to vector<192x192xf32>
    %cst_43 = arith.constant dense<0.000000e+00> : vector<2x192xf32>
    %70 = tpu.matmul %67, %69, %cst_43 {dimension_numbers = #tpu.dot_dimension_numbers<[1], [0], [0], [1], [0, 0, 1, 1], [], []>} : vector<2x192xf32>, vector<192x192xf32>, vector<2x192xf32> -> vector<2x192xf32>
    %c0_44 = arith.constant 0 : index
    %c0_45 = arith.constant 0 : index
    %c0_46 = arith.constant 0 : index
    %71 = vector.load %arg13[%c0_44, %c0_45, %c0_46] : memref<5x1x192xf32, #tpu.memory_space<vmem>>, vector<1x1x192xf32>
    %72 = vector.shape_cast %71 : vector<1x1x192xf32> to vector<1x192xf32>
    %73 = vector.broadcast %72 : vector<1x192xf32> to vector<2x192xf32>
    %74 = arith.addf %70, %73 : vector<2x192xf32>
    %cst_47 = arith.constant 0.000000e+00 : f32
    %75 = vector.broadcast %cst_47 : f32 to vector<2x192xf32>
    %76 = arith.cmpf ogt, %74, %75 : vector<2x192xf32>
    %cst_48 = arith.constant 0.00999999977 : f32
    %77 = vector.broadcast %cst_48 : f32 to vector<2x192xf32>
    %78 = arith.mulf %77, %74 : vector<2x192xf32>
    %79 = arith.select %76, %74, %78 : vector<2x192xi1>, vector<2x192xf32>
    %c1 = arith.constant 1 : index
    %c0_49 = arith.constant 0 : index
    %c0_50 = arith.constant 0 : index
    %80 = vector.load %arg12[%c1, %c0_49, %c0_50] : memref<5x192x192xf32, #tpu.memory_space<vmem>>, vector<1x192x192xf32>
    %81 = vector.shape_cast %80 : vector<1x192x192xf32> to vector<192x192xf32>
    %cst_51 = arith.constant dense<0.000000e+00> : vector<2x192xf32>
    %82 = tpu.matmul %79, %81, %cst_51 {dimension_numbers = #tpu.dot_dimension_numbers<[1], [0], [0], [1], [0, 0, 1, 1], [], []>} : vector<2x192xf32>, vector<192x192xf32>, vector<2x192xf32> -> vector<2x192xf32>
    %c1_52 = arith.constant 1 : index
    %c0_53 = arith.constant 0 : index
    %c0_54 = arith.constant 0 : index
    %83 = vector.load %arg13[%c1_52, %c0_53, %c0_54] : memref<5x1x192xf32, #tpu.memory_space<vmem>>, vector<1x1x192xf32>
    %84 = vector.shape_cast %83 : vector<1x1x192xf32> to vector<1x192xf32>
    %85 = vector.broadcast %84 : vector<1x192xf32> to vector<2x192xf32>
    %86 = arith.addf %82, %85 : vector<2x192xf32>
    %cst_55 = arith.constant 0.000000e+00 : f32
    %87 = vector.broadcast %cst_55 : f32 to vector<2x192xf32>
    %88 = arith.cmpf ogt, %86, %87 : vector<2x192xf32>
    %cst_56 = arith.constant 0.00999999977 : f32
    %89 = vector.broadcast %cst_56 : f32 to vector<2x192xf32>
    %90 = arith.mulf %89, %86 : vector<2x192xf32>
    %91 = arith.select %88, %86, %90 : vector<2x192xi1>, vector<2x192xf32>
    %c2 = arith.constant 2 : index
    %c0_57 = arith.constant 0 : index
    %c0_58 = arith.constant 0 : index
    %92 = vector.load %arg12[%c2, %c0_57, %c0_58] : memref<5x192x192xf32, #tpu.memory_space<vmem>>, vector<1x192x192xf32>
    %93 = vector.shape_cast %92 : vector<1x192x192xf32> to vector<192x192xf32>
    %cst_59 = arith.constant dense<0.000000e+00> : vector<2x192xf32>
    %94 = tpu.matmul %91, %93, %cst_59 {dimension_numbers = #tpu.dot_dimension_numbers<[1], [0], [0], [1], [0, 0, 1, 1], [], []>} : vector<2x192xf32>, vector<192x192xf32>, vector<2x192xf32> -> vector<2x192xf32>
    %c2_60 = arith.constant 2 : index
    %c0_61 = arith.constant 0 : index
    %c0_62 = arith.constant 0 : index
    %95 = vector.load %arg13[%c2_60, %c0_61, %c0_62] : memref<5x1x192xf32, #tpu.memory_space<vmem>>, vector<1x1x192xf32>
    %96 = vector.shape_cast %95 : vector<1x1x192xf32> to vector<1x192xf32>
    %97 = vector.broadcast %96 : vector<1x192xf32> to vector<2x192xf32>
    %98 = arith.addf %94, %97 : vector<2x192xf32>
    %cst_63 = arith.constant 0.000000e+00 : f32
    %99 = vector.broadcast %cst_63 : f32 to vector<2x192xf32>
    %100 = arith.cmpf ogt, %98, %99 : vector<2x192xf32>
    %cst_64 = arith.constant 0.00999999977 : f32
    %101 = vector.broadcast %cst_64 : f32 to vector<2x192xf32>
    %102 = arith.mulf %101, %98 : vector<2x192xf32>
    %103 = arith.select %100, %98, %102 : vector<2x192xi1>, vector<2x192xf32>
    %c3 = arith.constant 3 : index
    %c0_65 = arith.constant 0 : index
    %c0_66 = arith.constant 0 : index
    %104 = vector.load %arg12[%c3, %c0_65, %c0_66] : memref<5x192x192xf32, #tpu.memory_space<vmem>>, vector<1x192x192xf32>
    %105 = vector.shape_cast %104 : vector<1x192x192xf32> to vector<192x192xf32>
    %cst_67 = arith.constant dense<0.000000e+00> : vector<2x192xf32>
    %106 = tpu.matmul %103, %105, %cst_67 {dimension_numbers = #tpu.dot_dimension_numbers<[1], [0], [0], [1], [0, 0, 1, 1], [], []>} : vector<2x192xf32>, vector<192x192xf32>, vector<2x192xf32> -> vector<2x192xf32>
    %c3_68 = arith.constant 3 : index
    %c0_69 = arith.constant 0 : index
    %c0_70 = arith.constant 0 : index
    %107 = vector.load %arg13[%c3_68, %c0_69, %c0_70] : memref<5x1x192xf32, #tpu.memory_space<vmem>>, vector<1x1x192xf32>
    %108 = vector.shape_cast %107 : vector<1x1x192xf32> to vector<1x192xf32>
    %109 = vector.broadcast %108 : vector<1x192xf32> to vector<2x192xf32>
    %110 = arith.addf %106, %109 : vector<2x192xf32>
    %cst_71 = arith.constant 0.000000e+00 : f32
    %111 = vector.broadcast %cst_71 : f32 to vector<2x192xf32>
    %112 = arith.cmpf ogt, %110, %111 : vector<2x192xf32>
    %cst_72 = arith.constant 0.00999999977 : f32
    %113 = vector.broadcast %cst_72 : f32 to vector<2x192xf32>
    %114 = arith.mulf %113, %110 : vector<2x192xf32>
    %115 = arith.select %112, %110, %114 : vector<2x192xi1>, vector<2x192xf32>
    %c4 = arith.constant 4 : index
    %c0_73 = arith.constant 0 : index
    %c0_74 = arith.constant 0 : index
    %116 = vector.load %arg12[%c4, %c0_73, %c0_74] : memref<5x192x192xf32, #tpu.memory_space<vmem>>, vector<1x192x192xf32>
    %117 = vector.shape_cast %116 : vector<1x192x192xf32> to vector<192x192xf32>
    %cst_75 = arith.constant dense<0.000000e+00> : vector<2x192xf32>
    %118 = tpu.matmul %115, %117, %cst_75 {dimension_numbers = #tpu.dot_dimension_numbers<[1], [0], [0], [1], [0, 0, 1, 1], [], []>} : vector<2x192xf32>, vector<192x192xf32>, vector<2x192xf32> -> vector<2x192xf32>
    %c4_76 = arith.constant 4 : index
    %c0_77 = arith.constant 0 : index
    %c0_78 = arith.constant 0 : index
    %119 = vector.load %arg13[%c4_76, %c0_77, %c0_78] : memref<5x1x192xf32, #tpu.memory_space<vmem>>, vector<1x1x192xf32>
    %120 = vector.shape_cast %119 : vector<1x1x192xf32> to vector<1x192xf32>
    %121 = vector.broadcast %120 : vector<1x192xf32> to vector<2x192xf32>
    %122 = arith.addf %118, %121 : vector<2x192xf32>
    %cst_79 = arith.constant 0.000000e+00 : f32
    %123 = vector.broadcast %cst_79 : f32 to vector<2x192xf32>
    %124 = arith.cmpf ogt, %122, %123 : vector<2x192xf32>
    %cst_80 = arith.constant 0.00999999977 : f32
    %125 = vector.broadcast %cst_80 : f32 to vector<2x192xf32>
    %126 = arith.mulf %125, %122 : vector<2x192xf32>
    %127 = arith.select %124, %122, %126 : vector<2x192xi1>, vector<2x192xf32>
    %c0_81 = arith.constant 0 : index
    %c0_82 = arith.constant 0 : index
    %128 = vector.load %arg14[%c0_81, %c0_82] : memref<192x1xf32, #tpu.memory_space<vmem>>, vector<192x1xf32>
    %cst_83 = arith.constant dense<0.000000e+00> : vector<2x1xf32>
    %129 = tpu.matmul %127, %128, %cst_83 {dimension_numbers = #tpu.dot_dimension_numbers<[1], [0], [0], [1], [0, 0, 1, 1], [], []>} : vector<2x192xf32>, vector<192x1xf32>, vector<2x1xf32> -> vector<2x1xf32>
    %c0_84 = arith.constant 0 : index
    %c0_85 = arith.constant 0 : index
    %130 = vector.load %arg15[%c0_84, %c0_85] : memref<1x1xf32, #tpu.memory_space<vmem>>, vector<1x1xf32>
    %131 = vector.broadcast %130 : vector<1x1xf32> to vector<2x1xf32>
    %132 = arith.addf %129, %131 : vector<2x1xf32>
    %c0_86 = arith.constant 0 : index
    %c0_87 = arith.constant 0 : index
    %133 = vector.load %arg16[%c0_86, %c0_87] : memref<2x1xf32, #tpu.memory_space<vmem>>, vector<2x1xf32>
    tpu.vector_store %arg16[%c0_86, %c0_87], %132 {strides = array<i32>} : memref<2x1xf32, #tpu.memory_space<vmem>>, vector<2x1xf32>,
    return
  }
}

</mosaic_0001>

<llo_original>
// kernel: tpu_custom_call.1
$region0: #{tpu_custom_call.1}
  #allocation0 [shape = 'u32[]', space=smem, size = 0x4, offset = 0x4, fixed_abs, tag = 'smem constant byte address 0x4 - core index']
  #allocation1 [shape = 'u32[72,128]{1,0:T(1,128)}', space=vmem, size = 0x9000, scoped, tag = 'internal scratch']
  #allocation2 [shape = 'f32[1,1]{1,0:T(1,128)S(1)}', space=vmem, size = 0x200, scoped, tag = 'scoped memory for tpu_custom_call.1']
  %s0 = inlined_call_operand.vmem [shape: f32[32,32], index: 0, kind: input, shape index: {}]
  %s1 = inlined_call_operand.vmem [shape: f32[32,32], index: 1, kind: input, shape index: {}]
  %s2 = inlined_call_operand.vmem [shape: f32[2,32], index: 2, kind: input, shape index: {}]
  %s3 = inlined_call_operand.vmem [shape: f32[2,32], index: 3, kind: input, shape index: {}]
  %s4 = inlined_call_operand.vmem [shape: f32[64,32], index: 4, kind: input, shape index: {}]
  %s5 = inlined_call_operand.vmem [shape: f32[1,32], index: 5, kind: input, shape index: {}]
  %s6 = inlined_call_operand.vmem [shape: f32[64,32], index: 6, kind: input, shape index: {}]
  %s7 = inlined_call_operand.vmem [shape: f32[1,32], index: 7, kind: input, shape index: {}]
  %s8 = inlined_call_operand.vmem [shape: f32[64,32], index: 8, kind: input, shape index: {}]
  %s9 = inlined_call_operand.vmem [shape: f32[1,32], index: 9, kind: input, shape index: {}]
  %s10 = inlined_call_operand.vmem [shape: f32[1,192], index: 10, kind: input, shape index: {}]
  %s11 = inlined_call_operand.vmem [shape: f32[1,192], index: 11, kind: input, shape index: {}]
  %s12 = inlined_call_operand.hbm [shape: f32[5,192,192], index: 12, kind: input, shape index: {}]
  %s13 = inlined_call_operand.vmem [shape: f32[5,1,192], index: 13, kind: input, shape index: {}]
  %s14 = inlined_call_operand.vmem [shape: f32[192,1], index: 14, kind: input, shape index: {}]
  %s15 = inlined_call_operand.<no memory space> [shape: f32[1,1], index: 15, kind: input, shape index: {}]
  %s16 = inlined_call_operand.vmem [shape: f32[2,1], index: 16, kind: output, shape index: {}]
  %s17 = sld [smem:[#allocation0]]
  $region78: #{tpu_custom_call.1} parent=0
    _
  %s19 = ssub.s32 1, %s17
  %s20 = scalar_select 0, %s19, %s17
  %v21 = vstv %s15
  %22 = vst [vmem:[#allocation2] sm:$0x1] %v21
  $region1: #{tpu_custom_call.1} parent=0
    #allocation3 [shape = 'u8[983040]{0}', space=vmem, size = 0xf0000, scoped, tag = 'input window, operand 12, single buffered']
    #allocation4 [shape = 's32[1]{0}', space=sflag, size = 0x4, scoped, tag = 'scoped memory for tpu_custom_call.1']
    %23 = vsyncpa [#allocation4], 0
    // Predicated region
    $region2: #{tpu_custom_call.1} parent=1 // pred_check
      _
    $region3: #{tpu_custom_call.1} parent=1 // pred_check_branch
      %25 = sbr.rel (0) target = $region5
    $region4: #{tpu_custom_call.1} parent=1 // pred_region
      _
    $region5: #{tpu_custom_call.1} parent=1 // pred_fallthru
      _
    // Predicated region
    $region6: #{tpu_custom_call.1} parent=1 // pred_check
      _
    $region7: #{tpu_custom_call.1} parent=1 // pred_check_branch
      %27 = sbr.rel (0) target = $region9
    $region8: #{tpu_custom_call.1} parent=1 // pred_region
      _
    $region9: #{tpu_custom_call.1} parent=1 // pred_fallthru
      _
    // Predicated region
    $region10: #{tpu_custom_call.1} parent=1 // pred_check
      _
    $region11: #{tpu_custom_call.1} parent=1 // pred_check_branch
      %29 = sbr.rel (0) target = $region13
    $region12: #{tpu_custom_call.1} parent=1 // pred_region
      _
    $region13: #{tpu_custom_call.1} parent=1 // pred_fallthru
      _
    // Predicated region
    $region14: #{tpu_custom_call.1} parent=1 // pred_check
      _
    $region15: #{tpu_custom_call.1} parent=1 // pred_check_branch
      %31 = sbr.rel (0) target = $region17
    $region16: #{tpu_custom_call.1} parent=1 // pred_region
      _
    $region17: #{tpu_custom_call.1} parent=1 // pred_fallthru
      _
    // Predicated region
    $region18: #{tpu_custom_call.1} parent=1 // pred_check
      _
    $region19: #{tpu_custom_call.1} parent=1 // pred_check_branch
      %33 = sbr.rel (0) target = $region21
    $region20: #{tpu_custom_call.1} parent=1 // pred_region
      _
    $region21: #{tpu_custom_call.1} parent=1 // pred_fallthru
      _
    // Predicated region
    $region22: #{tpu_custom_call.1} parent=1 // pred_check
      _
    $region23: #{tpu_custom_call.1} parent=1 // pred_check_branch
      %35 = sbr.rel (0) target = $region25
    $region24: #{tpu_custom_call.1} parent=1 // pred_region
      _
    $region25: #{tpu_custom_call.1} parent=1 // pred_fallthru
      _
    // Predicated region
    $region26: #{tpu_custom_call.1} parent=1 // pred_check
      _
    $region27: #{tpu_custom_call.1} parent=1 // pred_check_branch
      %37 = sbr.rel (0) target = $region29
    $region28: #{tpu_custom_call.1} parent=1 // pred_region
      _
    $region29: #{tpu_custom_call.1} parent=1 // pred_fallthru
      _
    // Predicated region
    $region30: #{tpu_custom_call.1} parent=1 // pred_check
      _
    $region31: #{tpu_custom_call.1} parent=1 // pred_check_branch
      %39 = sbr.rel (0) target = $region33
    $region32: #{tpu_custom_call.1} parent=1 // pred_region
      _
    $region33: #{tpu_custom_call.1} parent=1 // pred_fallthru
      _
    // Predicated region
    $region34: #{tpu_custom_call.1} parent=1 // pred_check
      _
    $region35: #{tpu_custom_call.1} parent=1 // pred_check_branch
      %41 = sbr.rel (0) target = $region37
    $region36: #{tpu_custom_call.1} parent=1 // pred_region
      _
    $region37: #{tpu_custom_call.1} parent=1 // pred_fallthru
      _
    // Predicated region
    $region38: #{tpu_custom_call.1} parent=1 // pred_check
      _
    $region39: #{tpu_custom_call.1} parent=1 // pred_check_branch
      %43 = sbr.rel (0) target = $region41
    $region40: #{tpu_custom_call.1} parent=1 // pred_region
      _
    $region41: #{tpu_custom_call.1} parent=1 // pred_fallthru
      _
    // Predicated region
    $region42: #{tpu_custom_call.1} parent=1 // pred_check
      _
    $region43: #{tpu_custom_call.1} parent=1 // pred_check_branch
      %45 = sbr.rel (0) target = $region45
    $region44: #{tpu_custom_call.1} parent=1 // pred_region
      _
    $region45: #{tpu_custom_call.1} parent=1 // pred_fallthru
      _
    // Predicated region
    $region46: #{tpu_custom_call.1} parent=1 // pred_check
      _
    $region47: #{tpu_custom_call.1} parent=1 // pred_check_branch
      %47 = sbr.rel (0) target = $region49
    $region48: #{tpu_custom_call.1} parent=1 // pred_region
      _
    $region49: #{tpu_custom_call.1} parent=1 // pred_fallthru
      _
    // Predicated region
    $region50: #{tpu_custom_call.1} parent=1 // pred_check
      _
    $region51: #{tpu_custom_call.1} parent=1 // pred_check_branch
      %49 = sbr.rel (0) target = $region53
    $region52: #{tpu_custom_call.1} parent=1 // pred_region
      %51 = vsyncadd [#allocation4], 0
      %s52 = sshll.u32 %s12, 4
      %s53 = int_to_ptr.hbm [resolvable:$true] %s52
      %s54 = sshll.u32 [#allocation3], 4
      %s55 = int_to_ptr.vmem [resolvable:$true] %s54
      %60 = dma.hbm_to_vmem [thread:$0]  %s53, 30720, %s55, [#allocation4], 256, 256, 16
    $region53: #{tpu_custom_call.1} parent=1 // pred_fallthru
      _
    // Predicated region
    $region54: #{tpu_custom_call.1} parent=1 // pred_check
      _
    $region55: #{tpu_custom_call.1} parent=1 // pred_check_branch
      %62 = sbr.rel (0) target = $region57
    $region56: #{tpu_custom_call.1} parent=1 // pred_region
      _
    $region57: #{tpu_custom_call.1} parent=1 // pred_fallthru
      _
    // Predicated region
    $region58: #{tpu_custom_call.1} parent=1 // pred_check
      _
    $region59: #{tpu_custom_call.1} parent=1 // pred_check_branch
      %64 = sbr.rel (0) target = $region61
    $region60: #{tpu_custom_call.1} parent=1 // pred_region
      _
    $region61: #{tpu_custom_call.1} parent=1 // pred_fallthru
      _
    // Predicated region
    $region62: #{tpu_custom_call.1} parent=1 // pred_check
      _
    $region63: #{tpu_custom_call.1} parent=1 // pred_check_branch
      %66 = sbr.rel (0) target = $region65
    $region64: #{tpu_custom_call.1} parent=1 // pred_region
      _
    $region65: #{tpu_custom_call.1} parent=1 // pred_fallthru
      _
    // Predicated region
    $region66: #{tpu_custom_call.1} parent=1 // pred_check
      _
    $region67: #{tpu_custom_call.1} parent=1 // pred_check_branch
      %68 = sbr.rel (0) target = $region69
    $region68: #{tpu_custom_call.1} parent=1 // pred_region
      %70 = dma.done [#allocation4], 30720
    $region69: #{tpu_custom_call.1} parent=1 // pred_fallthru
      _
    %v71 = vld [vmem:[%s1] sm:$0xff]
    %v72 = vld [vmem:[%s1 + $0x8] sm:$0xff]
    %v73 = vld [vmem:[%s1 + $0x10] sm:$0xff]
    %v74 = vld [vmem:[%s1 + $0x18] sm:$0xff]
    %v75 = vld [vmem:[%s2] sm:$0x3]
    %v76 = vld [vmem:[%s3] sm:$0x3]
    %v77 = vld [vmem:[%s0] sm:$0xff]
    %v78 = vld [vmem:[%s0 + $0x8] sm:$0xff]
    %v79 = vld [vmem:[%s0 + $0x10] sm:$0xff]
    %v80 = vld [vmem:[%s0 + $0x18] sm:$0xff]
    %vm81 = vcmask 261120
    %v83 = vsel %vm81, %v71, 0
    %v86 = vsel %vm81, %v72, 0
    %v89 = vsel %vm81, %v73, 0
    %v92 = vsel %vm81, %v74, 0
    %94 = vmatpush.msra.mxu0 0.0
    %95 = vmatpush.msra.mxu0 0.0
    %96 = vmatpush.msra.mxu0 0.0
    %97 = vmatpush.msra.mxu0 0.0
    %98 = vmatpush.msra.mxu0 0.0
    %99 = vmatpush.msra.mxu0 0.0
    %100 = vmatpush.msra.mxu0 0.0
    %101 = vmatpush.msra.mxu0 0.0
    %102 = vmatpush.msra.mxu0 0.0
    %103 = vmatpush.msra.mxu0 0.0
    %104 = vmatpush.msra.mxu0 0.0
    %105 = vmatpush.msra.mxu0 0.0
    %106 = vmatpush.msra.mxu0 %v80
    %107 = vmatpush.msra.mxu0 %v79
    %108 = vmatpush.msra.mxu0 %v78
    %109 = vmatpush.msra.mxu0 %v77
    %110 = vmatmul.f32.gmra.mxu0 %v83
    %v111 = vpop.f32.mrf.mxu0
    %v112 = vadd.f32 0.0, %v111
    %113 = vmatmul.f32.gmra.mxu0 %v86
    %v114 = vpop.f32.mrf.mxu0
    %v115 = vadd.f32 0.0, %v114
    %116 = vmatmul.f32.gmra.mxu0 %v89
    %v117 = vpop.f32.mrf.mxu0
    %v118 = vadd.f32 0.0, %v117
    %119 = vmatmul.f32.gmra.mxu0 %v92
    %v120 = vpop.f32.mrf.mxu0
    %v121 = vadd.f32 0.0, %v120
    %122 = vdwg.mxu0
    %127 = vrot.lane.b32.xlu0 %v112, 32
    %v128 = vpop.permute.xlu0 %127
    %129 = vrot.lane.b32.xlu0 %v115, 32
    %v130 = vpop.permute.xlu0 %129
    %131 = vrot.lane.b32.xlu0 %v118, 32
    %v132 = vpop.permute.xlu0 %131
    %133 = vrot.lane.b32.xlu0 %v121, 32
    %v134 = vpop.permute.xlu0 %133
    %v139 = vsel %vm81, %v77, %v128
    %v140 = vsel %vm81, %v78, %v130
    %v141 = vsel %vm81, %v79, %v132
    %v142 = vsel %vm81, %v80, %v134
    %v143 = vld [vmem:[%s4] sm:$0xff]
    %v144 = vld [vmem:[%s4 + $0x8] sm:$0xff]
    %v145 = vld [vmem:[%s4 + $0x10] sm:$0xff]
    %v146 = vld [vmem:[%s4 + $0x18] sm:$0xff]
    %v147 = vld [vmem:[%s4 + $0x20] sm:$0xff]
    %v148 = vld [vmem:[%s4 + $0x28] sm:$0xff]
    %v149 = vld [vmem:[%s4 + $0x30] sm:$0xff]
    %v150 = vld [vmem:[%s4 + $0x38] sm:$0xff]
    %v151 = vld [vmem:[%s5] sm:$0x1]
    %v153 = vperm.slane %v151, 0
    %vm155 = vcmask 523264
    %v157 = vsel %vm155, %v139, 0
    %v160 = vsel %vm155, %v140, 0
    %v163 = vsel %vm155, %v141, 0
    %v166 = vsel %vm155, %v142, 0
    %168 = vmatpush.msra.mxu0 0.0
    %169 = vmatpush.msra.mxu0 0.0
    %170 = vmatpush.msra.mxu0 0.0
    %171 = vmatpush.msra.mxu0 0.0
    %172 = vmatpush.msra.mxu0 0.0
    %173 = vmatpush.msra.mxu0 0.0
    %174 = vmatpush.msra.mxu0 0.0
    %175 = vmatpush.msra.mxu0 0.0
    %176 = vmatpush.msra.mxu0 %v150
    %177 = vmatpush.msra.mxu0 %v149
    %178 = vmatpush.msra.mxu0 %v148
    %179 = vmatpush.msra.mxu0 %v147
    %180 = vmatpush.msra.mxu0 %v146
    %181 = vmatpush.msra.mxu0 %v145
    %182 = vmatpush.msra.mxu0 %v144
    %183 = vmatpush.msra.mxu0 %v143
    %184 = vmatmul.f32.gmra.mxu0 %v157
    %v185 = vpop.f32.mrf.mxu0
    %v186 = vadd.f32 %v153, %v185
    %187 = vmatmul.f32.gmra.mxu0 %v160
    %v188 = vpop.f32.mrf.mxu0
    %v189 = vadd.f32 %v153, %v188
    %190 = vmatmul.f32.gmra.mxu0 %v163
    %v191 = vpop.f32.mrf.mxu0
    %v192 = vadd.f32 %v153, %v191
    %193 = vmatmul.f32.gmra.mxu0 %v166
    %v194 = vpop.f32.mrf.mxu0
    %v195 = vadd.f32 %v153, %v194
    %196 = vdwg.mxu0
    %vm197 = vcmp.gt.f32.partialorder %v186, 0.0
    %vm198 = vcmp.gt.f32.partialorder %v189, 0.0
    %vm199 = vcmp.gt.f32.partialorder %v192, 0.0
    %vm200 = vcmp.gt.f32.partialorder %v195, 0.0
    %v201 = vmul.f32 %v186, 0.01
    %v202 = vmul.f32 %v189, 0.01
    %v203 = vmul.f32 %v192, 0.01
    %v204 = vmul.f32 %v195, 0.01
    %v205 = vsel %vm197, %v186, %v201
    %v206 = vsel %vm198, %v189, %v202
    %v207 = vsel %vm199, %v192, %v203
    %v208 = vsel %vm200, %v195, %v204
    %v210 = vsel %vm81, %v75, 0
    %212 = vmatpush.msra.mxu0 0.0
    %213 = vmatpush.msra.mxu0 0.0
    %214 = vmatpush.msra.mxu0 0.0
    %215 = vmatpush.msra.mxu0 0.0
    %216 = vmatpush.msra.mxu0 0.0
    %217 = vmatpush.msra.mxu0 0.0
    %218 = vmatpush.msra.mxu0 0.0
    %219 = vmatpush.msra.mxu0 0.0
    %220 = vmatpush.msra.mxu0 0.0
    %221 = vmatpush.msra.mxu0 0.0
    %222 = vmatpush.msra.mxu0 0.0
    %223 = vmatpush.msra.mxu0 0.0
    %224 = vmatpush.msra.mxu0 %v208
    %225 = vmatpush.msra.mxu0 %v207
    %226 = vmatpush.msra.mxu0 %v206
    %227 = vmatpush.msra.mxu0 %v205
    %228 = vmatmul.f32.gmra.mxu0 %v210
    %v229 = vpop.f32.mrf.mxu0
    %v230 = vadd.f32 0.0, %v229
    %231 = vdwg.mxu0
    %v232 = vperm.slane %v76, 0
    %v233 = vlaneseq
    %v234 = vshrl.u32 %v233, 7
    %236 = vset.pattern.permute.xlu0 %v234
    %237 = vperm.xlu0 %236, %v232
    %v238 = vpop.permute.xlu0 %237
    %v239 = vlaneseq
    %v240 = vshrl.u32 %v239, 7
    %v241 = vadd.s32 %v240, 8
    %242 = vset.pattern.permute.xlu0 %v241
    %243 = vperm.xlu0 %242, %v232
    %v244 = vpop.permute.xlu0 %243
    %v245 = vlaneseq
    %v246 = vshrl.u32 %v245, 7
    %v247 = vadd.s32 %v246, 16
    %248 = vset.pattern.permute.xlu0 %v247
    %249 = vperm.xlu0 %248, %v232
    %v250 = vpop.permute.xlu0 %249
    %v251 = vlaneseq
    %v252 = vshrl.u32 %v251, 7
    %v253 = vadd.s32 %v252, 24
    %254 = vset.pattern.permute.xlu0 %v253
    %255 = vperm.xlu0 %254, %v232
    %v256 = vpop.permute.xlu0 %255
    %v257 = vperm.slane %v76, 1
    %v258 = vlaneseq
    %v259 = vshrl.u32 %v258, 7
    %261 = vset.pattern.permute.xlu0 %v259
    %262 = vperm.xlu0 %261, %v257
    %v263 = vpop.permute.xlu0 %262
    %v264 = vlaneseq
    %v265 = vshrl.u32 %v264, 7
    %v266 = vadd.s32 %v265, 8
    %267 = vset.pattern.permute.xlu0 %v266
    %268 = vperm.xlu0 %267, %v257
    %v269 = vpop.permute.xlu0 %268
    %v270 = vlaneseq
    %v271 = vshrl.u32 %v270, 7
    %v272 = vadd.s32 %v271, 16
    %273 = vset.pattern.permute.xlu0 %v272
    %274 = vperm.xlu0 %273, %v257
    %v275 = vpop.permute.xlu0 %274
    %v276 = vlaneseq
    %v277 = vshrl.u32 %v276, 7
    %v278 = vadd.s32 %v277, 24
    %279 = vset.pattern.permute.xlu0 %v278
    %280 = vperm.xlu0 %279, %v257
    %v281 = vpop.permute.xlu0 %280
    %v282 = vadd.f32 %v205, %v238
    %v283 = vadd.f32 %v206, %v244
    %v284 = vadd.f32 %v207, %v250
    %v285 = vadd.f32 %v208, %v256
    %v286 = vadd.f32 %v205, %v263
    %v287 = vadd.f32 %v206, %v269
    %v288 = vadd.f32 %v207, %v275
    %v289 = vadd.f32 %v208, %v281
    %v290 = vsel %vm81, %v282, -inf
    %v291 = vsel %vm81, %v283, -inf
    %v292 = vsel %vm81, %v284, -inf
    %v293 = vmax.f32 %v290, %v292
    %v294 = vsel %vm81, %v285, -inf
    %v295 = vmax.f32 %v291, %v294
    %v296 = vmax.f32 %v293, %v295
    %v297 = vrot.slane %v296, 4
    %v298 = vmax.f32 %v296, %v297
    %v299 = vrot.slane %v298, 2
    %v300 = vmax.f32 %v298, %v299
    %v301 = vrot.slane %v300, 1
    %v302 = vmax.f32 %v300, %v301
    %v303 = vsel %vm81, %v286, -inf
    %v304 = vsel %vm81, %v287, -inf
    %v305 = vsel %vm81, %v288, -inf
    %v306 = vmax.f32 %v303, %v305
    %v307 = vsel %vm81, %v289, -inf
    %v308 = vmax.f32 %v304, %v307
    %v309 = vmax.f32 %v306, %v308
    %v310 = vrot.slane %v309, 4
    %v311 = vmax.f32 %v309, %v310
    %v312 = vrot.slane %v311, 2
    %v313 = vmax.f32 %v311, %v312
    %v314 = vrot.slane %v313, 1
    %v315 = vmax.f32 %v313, %v314
    %316 = vmatpush.msra.mxu0 0.0
    %317 = vmatpush.msra.mxu0 0.0
    %318 = vmatpush.msra.mxu0 0.0
    %319 = vmatpush.msra.mxu0 0.0
    %320 = vmatpush.msra.mxu0 0.0
    %321 = vmatpush.msra.mxu0 0.0
    %322 = vmatpush.msra.mxu0 0.0
    %323 = vmatpush.msra.mxu0 0.0
    %324 = vmatpush.msra.mxu0 0.0
    %325 = vmatpush.msra.mxu0 0.0
    %326 = vmatpush.msra.mxu0 0.0
    %327 = vmatpush.msra.mxu0 0.0
    %328 = vmatpush.msra.mxu0 %v208
    %329 = vmatpush.msra.mxu0 %v207
    %330 = vmatpush.msra.mxu0 %v206
    %331 = vmatpush.msra.mxu0 %v205
    %332 = vmatmul.f32.gmra.mxu0 %v83
    %v333 = vpop.f32.mrf.mxu0
    %v334 = vadd.f32 0.0, %v333
    %335 = vmatmul.f32.gmra.mxu0 %v86
    %v336 = vpop.f32.mrf.mxu0
    %v337 = vadd.f32 0.0, %v336
    %338 = vmatmul.f32.gmra.mxu0 %v89
    %v339 = vpop.f32.mrf.mxu0
    %v340 = vadd.f32 0.0, %v339
    %341 = vmatmul.f32.gmra.mxu0 %v92
    %v342 = vpop.f32.mrf.mxu0
    %v343 = vadd.f32 0.0, %v342
    %344 = vdwg.mxu0
    %349 = vrot.lane.b32.xlu0 %v334, 32
    %v350 = vpop.permute.xlu0 %349
    %351 = vrot.lane.b32.xlu0 %v337, 32
    %v352 = vpop.permute.xlu0 %351
    %353 = vrot.lane.b32.xlu0 %v340, 32
    %v354 = vpop.permute.xlu0 %353
    %355 = vrot.lane.b32.xlu0 %v343, 32
    %v356 = vpop.permute.xlu0 %355
    %v361 = vsel %vm81, %v205, %v350
    %v362 = vsel %vm81, %v206, %v352
    %v363 = vsel %vm81, %v207, %v354
    %v364 = vsel %vm81, %v208, %v356
    %v365 = vld [vmem:[%s6] sm:$0xff]
    %v366 = vld [vmem:[%s6 + $0x8] sm:$0xff]
    %v367 = vld [vmem:[%s6 + $0x10] sm:$0xff]
    %v368 = vld [vmem:[%s6 + $0x18] sm:$0xff]
    %v369 = vld [vmem:[%s6 + $0x20] sm:$0xff]
    %v370 = vld [vmem:[%s6 + $0x28] sm:$0xff]
    %v371 = vld [vmem:[%s6 + $0x30] sm:$0xff]
    %v372 = vld [vmem:[%s6 + $0x38] sm:$0xff]
    %v373 = vld [vmem:[%s7] sm:$0x1]
    %v375 = vperm.slane %v373, 0
    %v378 = vsel %vm155, %v361, 0
    %v381 = vsel %vm155, %v362, 0
    %v384 = vsel %vm155, %v363, 0
    %v387 = vsel %vm155, %v364, 0
    %389 = vmatpush.msra.mxu0 0.0
    %390 = vmatpush.msra.mxu0 0.0
    %391 = vmatpush.msra.mxu0 0.0
    %392 = vmatpush.msra.mxu0 0.0
    %393 = vmatpush.msra.mxu0 0.0
    %394 = vmatpush.msra.mxu0 0.0
    %395 = vmatpush.msra.mxu0 0.0
    %396 = vmatpush.msra.mxu0 0.0
    %397 = vmatpush.msra.mxu0 %v372
    %398 = vmatpush.msra.mxu0 %v371
    %399 = vmatpush.msra.mxu0 %v370
    %400 = vmatpush.msra.mxu0 %v369
    %401 = vmatpush.msra.mxu0 %v368
    %402 = vmatpush.msra.mxu0 %v367
    %403 = vmatpush.msra.mxu0 %v366
    %404 = vmatpush.msra.mxu0 %v365
    %405 = vmatmul.f32.gmra.mxu0 %v378
    %v406 = vpop.f32.mrf.mxu0
    %v407 = vadd.f32 %v375, %v406
    %408 = vmatmul.f32.gmra.mxu0 %v381
    %v409 = vpop.f32.mrf.mxu0
    %v410 = vadd.f32 %v375, %v409
    %411 = vmatmul.f32.gmra.mxu0 %v384
    %v412 = vpop.f32.mrf.mxu0
    %v413 = vadd.f32 %v375, %v412
    %414 = vmatmul.f32.gmra.mxu0 %v387
    %v415 = vpop.f32.mrf.mxu0
    %v416 = vadd.f32 %v375, %v415
    %417 = vdwg.mxu0
    %vm418 = vcmp.gt.f32.partialorder %v407, 0.0
    %vm419 = vcmp.gt.f32.partialorder %v410, 0.0
    %vm420 = vcmp.gt.f32.partialorder %v413, 0.0
    %vm421 = vcmp.gt.f32.partialorder %v416, 0.0
    %v422 = vmul.f32 %v407, 0.01
    %v423 = vmul.f32 %v410, 0.01
    %v424 = vmul.f32 %v413, 0.01
    %v425 = vmul.f32 %v416, 0.01
    %v426 = vsel %vm418, %v407, %v422
    %v427 = vsel %vm419, %v410, %v423
    %v428 = vsel %vm420, %v413, %v424
    %v429 = vsel %vm421, %v416, %v425
    %430 = vmatpush.msra.mxu0 0.0
    %431 = vmatpush.msra.mxu0 0.0
    %432 = vmatpush.msra.mxu0 0.0
    %433 = vmatpush.msra.mxu0 0.0
    %434 = vmatpush.msra.mxu0 0.0
    %435 = vmatpush.msra.mxu0 0.0
    %436 = vmatpush.msra.mxu0 0.0
    %437 = vmatpush.msra.mxu0 0.0
    %438 = vmatpush.msra.mxu0 0.0
    %439 = vmatpush.msra.mxu0 0.0
    %440 = vmatpush.msra.mxu0 0.0
    %441 = vmatpush.msra.mxu0 0.0
    %442 = vmatpush.msra.mxu0 %v429
    %443 = vmatpush.msra.mxu0 %v428
    %444 = vmatpush.msra.mxu0 %v427
    %445 = vmatpush.msra.mxu0 %v426
    %446 = vmatmul.f32.gmra.mxu0 %v210
    %v447 = vpop.f32.mrf.mxu0
    %v448 = vadd.f32 0.0, %v447
    %449 = vdwg.mxu0
    %v450 = vadd.f32 %v426, %v238
    %v451 = vadd.f32 %v427, %v244
    %v452 = vadd.f32 %v428, %v250
    %v453 = vadd.f32 %v429, %v256
    %v454 = vadd.f32 %v426, %v263
    %v455 = vadd.f32 %v427, %v269
    %v456 = vadd.f32 %v428, %v275
    %v457 = vadd.f32 %v429, %v281
    %v458 = vsel %vm81, %v450, -inf
    %v459 = vsel %vm81, %v451, -inf
    %v460 = vsel %vm81, %v452, -inf
    %v461 = vmax.f32 %v458, %v460
    %v462 = vsel %vm81, %v453, -inf
    %v463 = vmax.f32 %v459, %v462
    %v464 = vmax.f32 %v461, %v463
    %v465 = vrot.slane %v464, 4
    %v466 = vmax.f32 %v464, %v465
    %v467 = vrot.slane %v466, 2
    %v468 = vmax.f32 %v466, %v467
    %v469 = vrot.slane %v468, 1
    %v470 = vmax.f32 %v468, %v469
    %v471 = vsel %vm81, %v454, -inf
    %v472 = vsel %vm81, %v455, -inf
    %v473 = vsel %vm81, %v456, -inf
    %v474 = vmax.f32 %v471, %v473
    %v475 = vsel %vm81, %v457, -inf
    %v476 = vmax.f32 %v472, %v475
    %v477 = vmax.f32 %v474, %v476
    %v478 = vrot.slane %v477, 4
    %v479 = vmax.f32 %v477, %v478
    %v480 = vrot.slane %v479, 2
    %v481 = vmax.f32 %v479, %v480
    %v482 = vrot.slane %v481, 1
    %v483 = vmax.f32 %v481, %v482
    %484 = vmatpush.msra.mxu0 0.0
    %485 = vmatpush.msra.mxu0 0.0
    %486 = vmatpush.msra.mxu0 0.0
    %487 = vmatpush.msra.mxu0 0.0
    %488 = vmatpush.msra.mxu0 0.0
    %489 = vmatpush.msra.mxu0 0.0
    %490 = vmatpush.msra.mxu0 0.0
    %491 = vmatpush.msra.mxu0 0.0
    %492 = vmatpush.msra.mxu0 0.0
    %493 = vmatpush.msra.mxu0 0.0
    %494 = vmatpush.msra.mxu0 0.0
    %495 = vmatpush.msra.mxu0 0.0
    %496 = vmatpush.msra.mxu0 %v429
    %497 = vmatpush.msra.mxu0 %v428
    %498 = vmatpush.msra.mxu0 %v427
    %499 = vmatpush.msra.mxu0 %v426
    %500 = vmatmul.f32.gmra.mxu0 %v83
    %v501 = vpop.f32.mrf.mxu0
    %v502 = vadd.f32 0.0, %v501
    %503 = vmatmul.f32.gmra.mxu0 %v86
    %v504 = vpop.f32.mrf.mxu0
    %v505 = vadd.f32 0.0, %v504
    %506 = vmatmul.f32.gmra.mxu0 %v89
    %v507 = vpop.f32.mrf.mxu0
    %v508 = vadd.f32 0.0, %v507
    %509 = vmatmul.f32.gmra.mxu0 %v92
    %v510 = vpop.f32.mrf.mxu0
    %v511 = vadd.f32 0.0, %v510
    %512 = vdwg.mxu0
    %517 = vrot.lane.b32.xlu0 %v502, 32
    %v518 = vpop.permute.xlu0 %517
    %519 = vrot.lane.b32.xlu0 %v505, 32
    %v520 = vpop.permute.xlu0 %519
    %521 = vrot.lane.b32.xlu0 %v508, 32
    %v522 = vpop.permute.xlu0 %521
    %523 = vrot.lane.b32.xlu0 %v511, 32
    %v524 = vpop.permute.xlu0 %523
    %v529 = vsel %vm81, %v426, %v518
    %v530 = vsel %vm81, %v427, %v520
    %v531 = vsel %vm81, %v428, %v522
    %v532 = vsel %vm81, %v429, %v524
    %v533 = vld [vmem:[%s8] sm:$0xff]
    %v534 = vld [vmem:[%s8 + $0x8] sm:$0xff]
    %v535 = vld [vmem:[%s8 + $0x10] sm:$0xff]
    %v536 = vld [vmem:[%s8 + $0x18] sm:$0xff]
    %v537 = vld [vmem:[%s8 + $0x20] sm:$0xff]
    %v538 = vld [vmem:[%s8 + $0x28] sm:$0xff]
    %v539 = vld [vmem:[%s8 + $0x30] sm:$0xff]
    %v540 = vld [vmem:[%s8 + $0x38] sm:$0xff]
    %v541 = vld [vmem:[%s9] sm:$0x1]
    %v543 = vperm.slane %v541, 0
    %v546 = vsel %vm155, %v529, 0
    %v549 = vsel %vm155, %v530, 0
    %v552 = vsel %vm155, %v531, 0
    %v555 = vsel %vm155, %v532, 0
    %557 = vmatpush.msra.mxu0 0.0
    %558 = vmatpush.msra.mxu0 0.0
    %559 = vmatpush.msra.mxu0 0.0
    %560 = vmatpush.msra.mxu0 0.0
    %561 = vmatpush.msra.mxu0 0.0
    %562 = vmatpush.msra.mxu0 0.0
    %563 = vmatpush.msra.mxu0 0.0
    %564 = vmatpush.msra.mxu0 0.0
    %565 = vmatpush.msra.mxu0 %v540
    %566 = vmatpush.msra.mxu0 %v539
    %567 = vmatpush.msra.mxu0 %v538
    %568 = vmatpush.msra.mxu0 %v537
    %569 = vmatpush.msra.mxu0 %v536
    %570 = vmatpush.msra.mxu0 %v535
    %571 = vmatpush.msra.mxu0 %v534
    %572 = vmatpush.msra.mxu0 %v533
    %573 = vmatmul.f32.gmra.mxu0 %v546
    %v574 = vpop.f32.mrf.mxu0
    %v575 = vadd.f32 %v543, %v574
    %576 = vmatmul.f32.gmra.mxu0 %v549
    %v577 = vpop.f32.mrf.mxu0
    %v578 = vadd.f32 %v543, %v577
    %579 = vmatmul.f32.gmra.mxu0 %v552
    %v580 = vpop.f32.mrf.mxu0
    %v581 = vadd.f32 %v543, %v580
    %582 = vmatmul.f32.gmra.mxu0 %v555
    %v583 = vpop.f32.mrf.mxu0
    %v584 = vadd.f32 %v543, %v583
    %585 = vdwg.mxu0
    %vm586 = vcmp.gt.f32.partialorder %v575, 0.0
    %vm587 = vcmp.gt.f32.partialorder %v578, 0.0
    %vm588 = vcmp.gt.f32.partialorder %v581, 0.0
    %vm589 = vcmp.gt.f32.partialorder %v584, 0.0
    %v590 = vmul.f32 %v575, 0.01
    %v591 = vmul.f32 %v578, 0.01
    %v592 = vmul.f32 %v581, 0.01
    %v593 = vmul.f32 %v584, 0.01
    %v594 = vsel %vm586, %v575, %v590
    %v595 = vsel %vm587, %v578, %v591
    %v596 = vsel %vm588, %v581, %v592
    %v597 = vsel %vm589, %v584, %v593
    %598 = vmatpush.msra.mxu0 0.0
    %599 = vmatpush.msra.mxu0 0.0
    %600 = vmatpush.msra.mxu0 0.0
    %601 = vmatpush.msra.mxu0 0.0
    %602 = vmatpush.msra.mxu0 0.0
    %603 = vmatpush.msra.mxu0 0.0
    %604 = vmatpush.msra.mxu0 0.0
    %605 = vmatpush.msra.mxu0 0.0
    %606 = vmatpush.msra.mxu0 0.0
    %607 = vmatpush.msra.mxu0 0.0
    %608 = vmatpush.msra.mxu0 0.0
    %609 = vmatpush.msra.mxu0 0.0
    %610 = vmatpush.msra.mxu0 %v597
    %611 = vmatpush.msra.mxu0 %v596
    %612 = vmatpush.msra.mxu0 %v595
    %613 = vmatpush.msra.mxu0 %v594
    %614 = vmatmul.f32.gmra.mxu0 %v210
    %v615 = vpop.f32.mrf.mxu0
    %v616 = vadd.f32 0.0, %v615
    %617 = vdwg.mxu0
    %v618 = vadd.f32 %v594, %v238
    %v619 = vadd.f32 %v595, %v244
    %v620 = vadd.f32 %v596, %v250
    %v621 = vadd.f32 %v597, %v256
    %v622 = vadd.f32 %v594, %v263
    %v623 = vadd.f32 %v595, %v269
    %v624 = vadd.f32 %v596, %v275
    %v625 = vadd.f32 %v597, %v281
    %v626 = vsel %vm81, %v618, -inf
    %v627 = vsel %vm81, %v619, -inf
    %v628 = vsel %vm81, %v620, -inf
    %v629 = vmax.f32 %v626, %v628
    %v630 = vsel %vm81, %v621, -inf
    %v631 = vmax.f32 %v627, %v630
    %v632 = vmax.f32 %v629, %v631
    %v633 = vrot.slane %v632, 4
    %v634 = vmax.f32 %v632, %v633
    %v635 = vrot.slane %v634, 2
    %v636 = vmax.f32 %v634, %v635
    %v637 = vrot.slane %v636, 1
    %v638 = vmax.f32 %v636, %v637
    %v639 = vsel %vm81, %v622, -inf
    %v640 = vsel %vm81, %v623, -inf
    %v641 = vsel %vm81, %v624, -inf
    %v642 = vmax.f32 %v639, %v641
    %v643 = vsel %vm81, %v625, -inf
    %v644 = vmax.f32 %v640, %v643
    %v645 = vmax.f32 %v642, %v644
    %v646 = vrot.slane %v645, 4
    %v647 = vmax.f32 %v645, %v646
    %v648 = vrot.slane %v647, 2
    %v649 = vmax.f32 %v647, %v648
    %v650 = vrot.slane %v649, 1
    %v651 = vmax.f32 %v649, %v650
    %vm654 = vcmask 1041409
    %v655 = vsel %vm654, %v315, %v302
    %656 = vrot.lane.b32.xlu0 %v655, 32
    %v657 = vpop.permute.xlu0 %656
    %660 = vrot.lane.b32.xlu0 %v448, 64
    %v661 = vpop.permute.xlu0 %660
    %v665 = vsel %vm654, %v483, %v470
    %666 = vrot.lane.b32.xlu0 %v665, 96
    %v667 = vpop.permute.xlu0 %666
    %v671 = vsel %vm654, %v651, %v638
    %672 = vrot.lane.b32.xlu0 %v671, 32
    %v673 = vpop.permute.xlu0 %672
    %v675 = vsel %vm81, %v230, %v657
    %v676 = vsel %vm155, %v675, %v661
    %vm677 = vcmask 785408
    %v678 = vsel %vm677, %v676, %v667
    %v679 = vsel %vm81, %v616, %v673
    %v680 = vld [vmem:[%s10] sm:$0x3]
    %v682 = vperm.slane %v680, 0
    %v683 = vperm.slane %v680, 1
    %v686 = vmul.f32 %v678, %v682
    %v687 = vmul.f32 %v679, %v683
    %v688 = vld [vmem:[%s11] sm:$0x3]
    %v690 = vperm.slane %v688, 0
    %v691 = vperm.slane %v688, 1
    %v694 = vadd.f32 %v686, %v690
    %v695 = vadd.f32 %v687, %v691
    %v696 = vld [vmem:[#allocation3] sm:$0xff]
    %v697 = vld [vmem:[#allocation3 + $0x8] sm:$0xff]
    %v698 = vld [vmem:[#allocation3 + $0x10] sm:$0xff]
    %v699 = vld [vmem:[#allocation3 + $0x18] sm:$0xff]
    %v700 = vld [vmem:[#allocation3 + $0x20] sm:$0xff]
    %v701 = vld [vmem:[#allocation3 + $0x28] sm:$0xff]
    %v702 = vld [vmem:[#allocation3 + $0x30] sm:$0xff]
    %v703 = vld [vmem:[#allocation3 + $0x38] sm:$0xff]
    %v704 = vld [vmem:[#allocation3 + $0x40] sm:$0xff]
    %v705 = vld [vmem:[#allocation3 + $0x48] sm:$0xff]
    %v706 = vld [vmem:[#allocation3 + $0x50] sm:$0xff]
    %v707 = vld [vmem:[#allocation3 + $0x58] sm:$0xff]
    %v708 = vld [vmem:[#allocation3 + $0x60] sm:$0xff]
    %v709 = vld [vmem:[#allocation3 + $0x68] sm:$0xff]
    %v710 = vld [vmem:[#allocation3 + $0x70] sm:$0xff]
    %v711 = vld [vmem:[#allocation3 + $0x78] sm:$0xff]
    %v712 = vld [vmem:[#allocation3 + $0x80] sm:$0xff]
    %v713 = vld [vmem:[#allocation3 + $0x88] sm:$0xff]
    %v714 = vld [vmem:[#allocation3 + $0x90] sm:$0xff]
    %v715 = vld [vmem:[#allocation3 + $0x98] sm:$0xff]
    %v716 = vld [vmem:[#allocation3 + $0xa0] sm:$0xff]
    %v717 = vld [vmem:[#allocation3 + $0xa8] sm:$0xff]
    %v718 = vld [vmem:[#allocation3 + $0xb0] sm:$0xff]
    %v719 = vld [vmem:[#allocation3 + $0xb8] sm:$0xff]
    %v720 = vld [vmem:[#allocation3 + $0xc0] sm:$0xff]
    %v721 = vld [vmem:[#allocation3 + $0xc8] sm:$0xff]
    %v722 = vld [vmem:[#allocation3 + $0xd0] sm:$0xff]
    %v723 = vld [vmem:[#allocation3 + $0xd8] sm:$0xff]
    %v724 = vld [vmem:[#allocation3 + $0xe0] sm:$0xff]
    %v725 = vld [vmem:[#allocation3 + $0xe8] sm:$0xff]
    %v726 = vld [vmem:[#allocation3 + $0xf0] sm:$0xff]
    %v727 = vld [vmem:[#allocation3 + $0xf8] sm:$0xff]
    %v728 = vld [vmem:[#allocation3 + $0x100] sm:$0xff]
    %v729 = vld [vmem:[#allocation3 + $0x108] sm:$0xff]
    %v730 = vld [vmem:[#allocation3 + $0x110] sm:$0xff]
    %v731 = vld [vmem:[#allocation3 + $0x118] sm:$0xff]
    %v732 = vld [vmem:[#allocation3 + $0x120] sm:$0xff]
    %v733 = vld [vmem:[#allocation3 + $0x128] sm:$0xff]
    %v734 = vld [vmem:[#allocation3 + $0x130] sm:$0xff]
    %v735 = vld [vmem:[#allocation3 + $0x138] sm:$0xff]
    %v736 = vld [vmem:[#allocation3 + $0x140] sm:$0xff]
    %v737 = vld [vmem:[#allocation3 + $0x148] sm:$0xff]
    %v738 = vld [vmem:[#allocation3 + $0x150] sm:$0xff]
    %v739 = vld [vmem:[#allocation3 + $0x158] sm:$0xff]
    %v740 = vld [vmem:[#allocation3 + $0x160] sm:$0xff]
    %v741 = vld [vmem:[#allocation3 + $0x168] sm:$0xff]
    %v742 = vld [vmem:[#allocation3 + $0x170] sm:$0xff]
    %v743 = vld [vmem:[#allocation3 + $0x178] sm:$0xff]
    %v744 = vld [vmem:[%s13] sm:$0x3]
    %v746 = vperm.slane %v744, 0
    %v747 = vperm.slane %v744, 1
    %v751 = vsel %vm155, %v695, 0
    %753 = vmatpush.msra.mxu0 %v726
    %754 = vmatpush.msra.mxu0 %v724
    %755 = vmatpush.msra.mxu0 %v722
    %756 = vmatpush.msra.mxu0 %v720
    %757 = vmatpush.msra.mxu0 %v718
    %758 = vmatpush.msra.mxu0 %v716
    %759 = vmatpush.msra.mxu0 %v714
    %760 = vmatpush.msra.mxu0 %v712
    %761 = vmatpush.msra.mxu0 %v710
    %762 = vmatpush.msra.mxu0 %v708
    %763 = vmatpush.msra.mxu0 %v706
    %764 = vmatpush.msra.mxu0 %v704
    %765 = vmatpush.msra.mxu0 %v702
    %766 = vmatpush.msra.mxu0 %v700
    %767 = vmatpush.msra.mxu0 %v698
    %768 = vmatpush.msra.mxu0 %v696
    %769 = vmatmul.f32.gmra.mxu0 %v694
    %v770 = vpop.f32.mrf.mxu0
    %v771 = vadd.f32 %v746, %v770
    %772 = vdwg.mxu0
    %773 = vmatpush.msra.mxu0 0.0
    %774 = vmatpush.msra.mxu0 0.0
    %775 = vmatpush.msra.mxu0 0.0
    %776 = vmatpush.msra.mxu0 0.0
    %777 = vmatpush.msra.mxu0 0.0
    %778 = vmatpush.msra.mxu0 0.0
    %779 = vmatpush.msra.mxu0 0.0
    %780 = vmatpush.msra.mxu0 0.0
    %781 = vmatpush.msra.mxu0 %v742
    %782 = vmatpush.msra.mxu0 %v740
    %783 = vmatpush.msra.mxu0 %v738
    %784 = vmatpush.msra.mxu0 %v736
    %785 = vmatpush.msra.mxu0 %v734
    %786 = vmatpush.msra.mxu0 %v732
    %787 = vmatpush.msra.mxu0 %v730
    %788 = vmatpush.msra.mxu0 %v728
    %789 = vmatmul.f32.gmra.mxu0 %v751
    %v790 = vpop.f32.mrf.mxu0
    %v791 = vadd.f32 %v771, %v790
    %792 = vdwg.mxu0
    %793 = vmatpush.msra.mxu0 %v727
    %794 = vmatpush.msra.mxu0 %v725
    %795 = vmatpush.msra.mxu0 %v723
    %796 = vmatpush.msra.mxu0 %v721
    %797 = vmatpush.msra.mxu0 %v719
    %798 = vmatpush.msra.mxu0 %v717
    %799 = vmatpush.msra.mxu0 %v715
    %800 = vmatpush.msra.mxu0 %v713
    %801 = vmatpush.msra.mxu0 %v711
    %802 = vmatpush.msra.mxu0 %v709
    %803 = vmatpush.msra.mxu0 %v707
    %804 = vmatpush.msra.mxu0 %v705
    %805 = vmatpush.msra.mxu0 %v703
    %806 = vmatpush.msra.mxu0 %v701
    %807 = vmatpush.msra.mxu0 %v699
    %808 = vmatpush.msra.mxu0 %v697
    %809 = vmatmul.f32.gmra.mxu0 %v694
    %v810 = vpop.f32.mrf.mxu0
    %v811 = vadd.f32 %v747, %v810
    %812 = vdwg.mxu0
    %813 = vmatpush.msra.mxu0 0.0
    %814 = vmatpush.msra.mxu0 0.0
    %815 = vmatpush.msra.mxu0 0.0
    %816 = vmatpush.msra.mxu0 0.0
    %817 = vmatpush.msra.mxu0 0.0
    %818 = vmatpush.msra.mxu0 0.0
    %819 = vmatpush.msra.mxu0 0.0
    %820 = vmatpush.msra.mxu0 0.0
    %821 = vmatpush.msra.mxu0 %v743
    %822 = vmatpush.msra.mxu0 %v741
    %823 = vmatpush.msra.mxu0 %v739
    %824 = vmatpush.msra.mxu0 %v737
    %825 = vmatpush.msra.mxu0 %v735
    %826 = vmatpush.msra.mxu0 %v733
    %827 = vmatpush.msra.mxu0 %v731
    %828 = vmatpush.msra.mxu0 %v729
    %829 = vmatmul.f32.gmra.mxu0 %v751
    %v830 = vpop.f32.mrf.mxu0
    %v831 = vadd.f32 %v811, %v830
    %832 = vdwg.mxu0
    %vm833 = vcmp.gt.f32.partialorder %v791, 0.0
    %vm834 = vcmp.gt.f32.partialorder %v831, 0.0
    %v835 = vmul.f32 %v791, 0.01
    %v836 = vmul.f32 %v831, 0.01
    %v837 = vsel %vm833, %v791, %v835
    %v838 = vsel %vm834, %v831, %v836
    %s839 = scalar_lea.vmem [#allocation3], 384
    %v840 = vld [vmem:[%s839] sm:$0xff]
    %v841 = vld [vmem:[%s839 + $0x8] sm:$0xff]
    %v842 = vld [vmem:[%s839 + $0x10] sm:$0xff]
    %v843 = vld [vmem:[%s839 + $0x18] sm:$0xff]
    %v844 = vld [vmem:[%s839 + $0x20] sm:$0xff]
    %v845 = vld [vmem:[%s839 + $0x28] sm:$0xff]
    %v846 = vld [vmem:[%s839 + $0x30] sm:$0xff]
    %v847 = vld [vmem:[%s839 + $0x38] sm:$0xff]
    %v848 = vld [vmem:[%s839 + $0x40] sm:$0xff]
    %v849 = vld [vmem:[%s839 + $0x48] sm:$0xff]
    %v850 = vld [vmem:[%s839 + $0x50] sm:$0xff]
    %v851 = vld [vmem:[%s839 + $0x58] sm:$0xff]
    %v852 = vld [vmem:[%s839 + $0x60] sm:$0xff]
    %v853 = vld [vmem:[%s839 + $0x68] sm:$0xff]
    %v854 = vld [vmem:[%s839 + $0x70] sm:$0xff]
    %v855 = vld [vmem:[%s839 + $0x78] sm:$0xff]
    %v856 = vld [vmem:[%s839 + $0x80] sm:$0xff]
    %v857 = vld [vmem:[%s839 + $0x88] sm:$0xff]
    %v858 = vld [vmem:[%s839 + $0x90] sm:$0xff]
    %v859 = vld [vmem:[%s839 + $0x98] sm:$0xff]
    %v860 = vld [vmem:[%s839 + $0xa0] sm:$0xff]
    %v861 = vld [vmem:[%s839 + $0xa8] sm:$0xff]
    %v862 = vld [vmem:[%s839 + $0xb0] sm:$0xff]
    %v863 = vld [vmem:[%s839 + $0xb8] sm:$0xff]
    %v864 = vld [vmem:[%s839 + $0xc0] sm:$0xff]
    %v865 = vld [vmem:[%s839 + $0xc8] sm:$0xff]
    %v866 = vld [vmem:[%s839 + $0xd0] sm:$0xff]
    %v867 = vld [vmem:[%s839 + $0xd8] sm:$0xff]
    %v868 = vld [vmem:[%s839 + $0xe0] sm:$0xff]
    %v869 = vld [vmem:[%s839 + $0xe8] sm:$0xff]
    %v870 = vld [vmem:[%s839 + $0xf0] sm:$0xff]
    %v871 = vld [vmem:[%s839 + $0xf8] sm:$0xff]
    %v872 = vld [vmem:[%s839 + $0x100] sm:$0xff]
    %v873 = vld [vmem:[%s839 + $0x108] sm:$0xff]
    %v874 = vld [vmem:[%s839 + $0x110] sm:$0xff]
    %v875 = vld [vmem:[%s839 + $0x118] sm:$0xff]
    %v876 = vld [vmem:[%s839 + $0x120] sm:$0xff]
    %v877 = vld [vmem:[%s839 + $0x128] sm:$0xff]
    %v878 = vld [vmem:[%s839 + $0x130] sm:$0xff]
    %v879 = vld [vmem:[%s839 + $0x138] sm:$0xff]
    %v880 = vld [vmem:[%s839 + $0x140] sm:$0xff]
    %v881 = vld [vmem:[%s839 + $0x148] sm:$0xff]
    %v882 = vld [vmem:[%s839 + $0x150] sm:$0xff]
    %v883 = vld [vmem:[%s839 + $0x158] sm:$0xff]
    %v884 = vld [vmem:[%s839 + $0x160] sm:$0xff]
    %v885 = vld [vmem:[%s839 + $0x168] sm:$0xff]
    %v886 = vld [vmem:[%s839 + $0x170] sm:$0xff]
    %v887 = vld [vmem:[%s839 + $0x178] sm:$0xff]
    %s888 = scalar_lea.vmem %s13, 2
    %v889 = vld [vmem:[%s888] sm:$0x3]
    %v891 = vperm.slane %v889, 0
    %v892 = vperm.slane %v889, 1
    %v896 = vsel %vm155, %v838, 0
    %898 = vmatpush.msra.mxu0 %v870
    %899 = vmatpush.msra.mxu0 %v868
    %900 = vmatpush.msra.mxu0 %v866
    %901 = vmatpush.msra.mxu0 %v864
    %902 = vmatpush.msra.mxu0 %v862
    %903 = vmatpush.msra.mxu0 %v860
    %904 = vmatpush.msra.mxu0 %v858
    %905 = vmatpush.msra.mxu0 %v856
    %906 = vmatpush.msra.mxu0 %v854
    %907 = vmatpush.msra.mxu0 %v852
    %908 = vmatpush.msra.mxu0 %v850
    %909 = vmatpush.msra.mxu0 %v848
    %910 = vmatpush.msra.mxu0 %v846
    %911 = vmatpush.msra.mxu0 %v844
    %912 = vmatpush.msra.mxu0 %v842
    %913 = vmatpush.msra.mxu0 %v840
    %914 = vmatmul.f32.gmra.mxu0 %v837
    %v915 = vpop.f32.mrf.mxu0
    %v916 = vadd.f32 %v891, %v915
    %917 = vdwg.mxu0
    %918 = vmatpush.msra.mxu0 0.0
    %919 = vmatpush.msra.mxu0 0.0
    %920 = vmatpush.msra.mxu0 0.0
    %921 = vmatpush.msra.mxu0 0.0
    %922 = vmatpush.msra.mxu0 0.0
    %923 = vmatpush.msra.mxu0 0.0
    %924 = vmatpush.msra.mxu0 0.0
    %925 = vmatpush.msra.mxu0 0.0
    %926 = vmatpush.msra.mxu0 %v886
    %927 = vmatpush.msra.mxu0 %v884
    %928 = vmatpush.msra.mxu0 %v882
    %929 = vmatpush.msra.mxu0 %v880
    %930 = vmatpush.msra.mxu0 %v878
    %931 = vmatpush.msra.mxu0 %v876
    %932 = vmatpush.msra.mxu0 %v874
    %933 = vmatpush.msra.mxu0 %v872
    %934 = vmatmul.f32.gmra.mxu0 %v896
    %v935 = vpop.f32.mrf.mxu0
    %v936 = vadd.f32 %v916, %v935
    %937 = vdwg.mxu0
    %938 = vmatpush.msra.mxu0 %v871
    %939 = vmatpush.msra.mxu0 %v869
    %940 = vmatpush.msra.mxu0 %v867
    %941 = vmatpush.msra.mxu0 %v865
    %942 = vmatpush.msra.mxu0 %v863
    %943 = vmatpush.msra.mxu0 %v861
    %944 = vmatpush.msra.mxu0 %v859
    %945 = vmatpush.msra.mxu0 %v857
    %946 = vmatpush.msra.mxu0 %v855
    %947 = vmatpush.msra.mxu0 %v853
    %948 = vmatpush.msra.mxu0 %v851
    %949 = vmatpush.msra.mxu0 %v849
    %950 = vmatpush.msra.mxu0 %v847
    %951 = vmatpush.msra.mxu0 %v845
    %952 = vmatpush.msra.mxu0 %v843
    %953 = vmatpush.msra.mxu0 %v841
    %954 = vmatmul.f32.gmra.mxu0 %v837
    %v955 = vpop.f32.mrf.mxu0
    %v956 = vadd.f32 %v892, %v955
    %957 = vdwg.mxu0
    %958 = vmatpush.msra.mxu0 0.0
    %959 = vmatpush.msra.mxu0 0.0
    %960 = vmatpush.msra.mxu0 0.0
    %961 = vmatpush.msra.mxu0 0.0
    %962 = vmatpush.msra.mxu0 0.0
    %963 = vmatpush.msra.mxu0 0.0
    %964 = vmatpush.msra.mxu0 0.0
    %965 = vmatpush.msra.mxu0 0.0
    %966 = vmatpush.msra.mxu0 %v887
    %967 = vmatpush.msra.mxu0 %v885
    %968 = vmatpush.msra.mxu0 %v883
    %969 = vmatpush.msra.mxu0 %v881
    %970 = vmatpush.msra.mxu0 %v879
    %971 = vmatpush.msra.mxu0 %v877
    %972 = vmatpush.msra.mxu0 %v875
    %973 = vmatpush.msra.mxu0 %v873
    %974 = vmatmul.f32.gmra.mxu0 %v896
    %v975 = vpop.f32.mrf.mxu0
    %v976 = vadd.f32 %v956, %v975
    %977 = vdwg.mxu0
    %vm978 = vcmp.gt.f32.partialorder %v936, 0.0
    %vm979 = vcmp.gt.f32.partialorder %v976, 0.0
    %v980 = vmul.f32 %v936, 0.01
    %v981 = vmul.f32 %v976, 0.01
    %v982 = vsel %vm978, %v936, %v980
    %v983 = vsel %vm979, %v976, %v981
    %s984 = scalar_lea.vmem [#allocation3], 768
    %v985 = vld [vmem:[%s984] sm:$0xff]
    %v986 = vld [vmem:[%s984 + $0x8] sm:$0xff]
    %v987 = vld [vmem:[%s984 + $0x10] sm:$0xff]
    %v988 = vld [vmem:[%s984 + $0x18] sm:$0xff]
    %v989 = vld [vmem:[%s984 + $0x20] sm:$0xff]
    %v990 = vld [vmem:[%s984 + $0x28] sm:$0xff]
    %v991 = vld [vmem:[%s984 + $0x30] sm:$0xff]
    %v992 = vld [vmem:[%s984 + $0x38] sm:$0xff]
    %v993 = vld [vmem:[%s984 + $0x40] sm:$0xff]
    %v994 = vld [vmem:[%s984 + $0x48] sm:$0xff]
    %v995 = vld [vmem:[%s984 + $0x50] sm:$0xff]
    %v996 = vld [vmem:[%s984 + $0x58] sm:$0xff]
    %v997 = vld [vmem:[%s984 + $0x60] sm:$0xff]
    %v998 = vld [vmem:[%s984 + $0x68] sm:$0xff]
    %v999 = vld [vmem:[%s984 + $0x70] sm:$0xff]
    %v1000 = vld [vmem:[%s984 + $0x78] sm:$0xff]
    %v1001 = vld [vmem:[%s984 + $0x80] sm:$0xff]
    %v1002 = vld [vmem:[%s984 + $0x88] sm:$0xff]
    %v1003 = vld [vmem:[%s984 + $0x90] sm:$0xff]
    %v1004 = vld [vmem:[%s984 + $0x98] sm:$0xff]
    %v1005 = vld [vmem:[%s984 + $0xa0] sm:$0xff]
    %v1006 = vld [vmem:[%s984 + $0xa8] sm:$0xff]
    %v1007 = vld [vmem:[%s984 + $0xb0] sm:$0xff]
    %v1008 = vld [vmem:[%s984 + $0xb8] sm:$0xff]
    %v1009 = vld [vmem:[%s984 + $0xc0] sm:$0xff]
    %v1010 = vld [vmem:[%s984 + $0xc8] sm:$0xff]
    %v1011 = vld [vmem:[%s984 + $0xd0] sm:$0xff]
    %v1012 = vld [vmem:[%s984 + $0xd8] sm:$0xff]
    %v1013 = vld [vmem:[%s984 + $0xe0] sm:$0xff]
    %v1014 = vld [vmem:[%s984 + $0xe8] sm:$0xff]
    %v1015 = vld [vmem:[%s984 + $0xf0] sm:$0xff]
    %v1016 = vld [vmem:[%s984 + $0xf8] sm:$0xff]
    %v1017 = vld [vmem:[%s984 + $0x100] sm:$0xff]
    %v1018 = vld [vmem:[%s984 + $0x108] sm:$0xff]
    %v1019 = vld [vmem:[%s984 + $0x110] sm:$0xff]
    %v1020 = vld [vmem:[%s984 + $0x118] sm:$0xff]
    %v1021 = vld [vmem:[%s984 + $0x120] sm:$0xff]
    %v1022 = vld [vmem:[%s984 + $0x128] sm:$0xff]
    %v1023 = vld [vmem:[%s984 + $0x130] sm:$0xff]
    %v1024 = vld [vmem:[%s984 + $0x138] sm:$0xff]
    %v1025 = vld [vmem:[%s984 + $0x140] sm:$0xff]
    %v1026 = vld [vmem:[%s984 + $0x148] sm:$0xff]
    %v1027 = vld [vmem:[%s984 + $0x150] sm:$0xff]
    %v1028 = vld [vmem:[%s984 + $0x158] sm:$0xff]
    %v1029 = vld [vmem:[%s984 + $0x160] sm:$0xff]
    %v1030 = vld [vmem:[%s984 + $0x168] sm:$0xff]
    %v1031 = vld [vmem:[%s984 + $0x170] sm:$0xff]
    %v1032 = vld [vmem:[%s984 + $0x178] sm:$0xff]
    %s1033 = scalar_lea.vmem %s13, 4
    %v1034 = vld [vmem:[%s1033] sm:$0x3]
    %v1036 = vperm.slane %v1034, 0
    %v1037 = vperm.slane %v1034, 1
    %v1041 = vsel %vm155, %v983, 0
    %1043 = vmatpush.msra.mxu0 %v1015
    %1044 = vmatpush.msra.mxu0 %v1013
    %1045 = vmatpush.msra.mxu0 %v1011
    %1046 = vmatpush.msra.mxu0 %v1009
    %1047 = vmatpush.msra.mxu0 %v1007
    %1048 = vmatpush.msra.mxu0 %v1005
    %1049 = vmatpush.msra.mxu0 %v1003
    %1050 = vmatpush.msra.mxu0 %v1001
    %1051 = vmatpush.msra.mxu0 %v999
    %1052 = vmatpush.msra.mxu0 %v997
    %1053 = vmatpush.msra.mxu0 %v995
    %1054 = vmatpush.msra.mxu0 %v993
    %1055 = vmatpush.msra.mxu0 %v991
    %1056 = vmatpush.msra.mxu0 %v989
    %1057 = vmatpush.msra.mxu0 %v987
    %1058 = vmatpush.msra.mxu0 %v985
    %1059 = vmatmul.f32.gmra.mxu0 %v982
    %v1060 = vpop.f32.mrf.mxu0
    %v1061 = vadd.f32 %v1036, %v1060
    %1062 = vdwg.mxu0
    %1063 = vmatpush.msra.mxu0 0.0
    %1064 = vmatpush.msra.mxu0 0.0
    %1065 = vmatpush.msra.mxu0 0.0
    %1066 = vmatpush.msra.mxu0 0.0
    %1067 = vmatpush.msra.mxu0 0.0
    %1068 = vmatpush.msra.mxu0 0.0
    %1069 = vmatpush.msra.mxu0 0.0
    %1070 = vmatpush.msra.mxu0 0.0
    %1071 = vmatpush.msra.mxu0 %v1031
    %1072 = vmatpush.msra.mxu0 %v1029
    %1073 = vmatpush.msra.mxu0 %v1027
    %1074 = vmatpush.msra.mxu0 %v1025
    %1075 = vmatpush.msra.mxu0 %v1023
    %1076 = vmatpush.msra.mxu0 %v1021
    %1077 = vmatpush.msra.mxu0 %v1019
    %1078 = vmatpush.msra.mxu0 %v1017
    %1079 = vmatmul.f32.gmra.mxu0 %v1041
    %v1080 = vpop.f32.mrf.mxu0
    %v1081 = vadd.f32 %v1061, %v1080
    %1082 = vdwg.mxu0
    %1083 = vmatpush.msra.mxu0 %v1016
    %1084 = vmatpush.msra.mxu0 %v1014
    %1085 = vmatpush.msra.mxu0 %v1012
    %1086 = vmatpush.msra.mxu0 %v1010
    %1087 = vmatpush.msra.mxu0 %v1008
    %1088 = vmatpush.msra.mxu0 %v1006
    %1089 = vmatpush.msra.mxu0 %v1004
    %1090 = vmatpush.msra.mxu0 %v1002
    %1091 = vmatpush.msra.mxu0 %v1000
    %1092 = vmatpush.msra.mxu0 %v998
    %1093 = vmatpush.msra.mxu0 %v996
    %1094 = vmatpush.msra.mxu0 %v994
    %1095 = vmatpush.msra.mxu0 %v992
    %1096 = vmatpush.msra.mxu0 %v990
    %1097 = vmatpush.msra.mxu0 %v988
    %1098 = vmatpush.msra.mxu0 %v986
    %1099 = vmatmul.f32.gmra.mxu0 %v982
    %v1100 = vpop.f32.mrf.mxu0
    %v1101 = vadd.f32 %v1037, %v1100
    %1102 = vdwg.mxu0
    %1103 = vmatpush.msra.mxu0 0.0
    %1104 = vmatpush.msra.mxu0 0.0
    %1105 = vmatpush.msra.mxu0 0.0
    %1106 = vmatpush.msra.mxu0 0.0
    %1107 = vmatpush.msra.mxu0 0.0
    %1108 = vmatpush.msra.mxu0 0.0
    %1109 = vmatpush.msra.mxu0 0.0
    %1110 = vmatpush.msra.mxu0 0.0
    %1111 = vmatpush.msra.mxu0 %v1032
    %1112 = vmatpush.msra.mxu0 %v1030
    %1113 = vmatpush.msra.mxu0 %v1028
    %1114 = vmatpush.msra.mxu0 %v1026
    %1115 = vmatpush.msra.mxu0 %v1024
    %1116 = vmatpush.msra.mxu0 %v1022
    %1117 = vmatpush.msra.mxu0 %v1020
    %1118 = vmatpush.msra.mxu0 %v1018
    %1119 = vmatmul.f32.gmra.mxu0 %v1041
    %v1120 = vpop.f32.mrf.mxu0
    %v1121 = vadd.f32 %v1101, %v1120
    %1122 = vdwg.mxu0
    %vm1123 = vcmp.gt.f32.partialorder %v1081, 0.0
    %vm1124 = vcmp.gt.f32.partialorder %v1121, 0.0
    %v1125 = vmul.f32 %v1081, 0.01
    %v1126 = vmul.f32 %v1121, 0.01
    %v1127 = vsel %vm1123, %v1081, %v1125
    %v1128 = vsel %vm1124, %v1121, %v1126
    %s1129 = scalar_lea.vmem [#allocation3], 1152
    %v1130 = vld [vmem:[%s1129] sm:$0xff]
    %v1131 = vld [vmem:[%s1129 + $0x8] sm:$0xff]
    %v1132 = vld [vmem:[%s1129 + $0x10] sm:$0xff]
    %v1133 = vld [vmem:[%s1129 + $0x18] sm:$0xff]
    %v1134 = vld [vmem:[%s1129 + $0x20] sm:$0xff]
    %v1135 = vld [vmem:[%s1129 + $0x28] sm:$0xff]
    %v1136 = vld [vmem:[%s1129 + $0x30] sm:$0xff]
    %v1137 = vld [vmem:[%s1129 + $0x38] sm:$0xff]
    %v1138 = vld [vmem:[%s1129 + $0x40] sm:$0xff]
    %v1139 = vld [vmem:[%s1129 + $0x48] sm:$0xff]
    %v1140 = vld [vmem:[%s1129 + $0x50] sm:$0xff]
    %v1141 = vld [vmem:[%s1129 + $0x58] sm:$0xff]
    %v1142 = vld [vmem:[%s1129 + $0x60] sm:$0xff]
    %v1143 = vld [vmem:[%s1129 + $0x68] sm:$0xff]
    %v1144 = vld [vmem:[%s1129 + $0x70] sm:$0xff]
    %v1145 = vld [vmem:[%s1129 + $0x78] sm:$0xff]
    %v1146 = vld [vmem:[%s1129 + $0x80] sm:$0xff]
    %v1147 = vld [vmem:[%s1129 + $0x88] sm:$0xff]
    %v1148 = vld [vmem:[%s1129 + $0x90] sm:$0xff]
    %v1149 = vld [vmem:[%s1129 + $0x98] sm:$0xff]
    %v1150 = vld [vmem:[%s1129 + $0xa0] sm:$0xff]
    %v1151 = vld [vmem:[%s1129 + $0xa8] sm:$0xff]
    %v1152 = vld [vmem:[%s1129 + $0xb0] sm:$0xff]
    %v1153 = vld [vmem:[%s1129 + $0xb8] sm:$0xff]
    %v1154 = vld [vmem:[%s1129 + $0xc0] sm:$0xff]
    %v1155 = vld [vmem:[%s1129 + $0xc8] sm:$0xff]
    %v1156 = vld [vmem:[%s1129 + $0xd0] sm:$0xff]
    %v1157 = vld [vmem:[%s1129 + $0xd8] sm:$0xff]
    %v1158 = vld [vmem:[%s1129 + $0xe0] sm:$0xff]
    %v1159 = vld [vmem:[%s1129 + $0xe8] sm:$0xff]
    %v1160 = vld [vmem:[%s1129 + $0xf0] sm:$0xff]
    %v1161 = vld [vmem:[%s1129 + $0xf8] sm:$0xff]
    %v1162 = vld [vmem:[%s1129 + $0x100] sm:$0xff]
    %v1163 = vld [vmem:[%s1129 + $0x108] sm:$0xff]
    %v1164 = vld [vmem:[%s1129 + $0x110] sm:$0xff]
    %v1165 = vld [vmem:[%s1129 + $0x118] sm:$0xff]
    %v1166 = vld [vmem:[%s1129 + $0x120] sm:$0xff]
    %v1167 = vld [vmem:[%s1129 + $0x128] sm:$0xff]
    %v1168 = vld [vmem:[%s1129 + $0x130] sm:$0xff]
    %v1169 = vld [vmem:[%s1129 + $0x138] sm:$0xff]
    %v1170 = vld [vmem:[%s1129 + $0x140] sm:$0xff]
    %v1171 = vld [vmem:[%s1129 + $0x148] sm:$0xff]
    %v1172 = vld [vmem:[%s1129 + $0x150] sm:$0xff]
    %v1173 = vld [vmem:[%s1129 + $0x158] sm:$0xff]
    %v1174 = vld [vmem:[%s1129 + $0x160] sm:$0xff]
    %v1175 = vld [vmem:[%s1129 + $0x168] sm:$0xff]
    %v1176 = vld [vmem:[%s1129 + $0x170] sm:$0xff]
    %v1177 = vld [vmem:[%s1129 + $0x178] sm:$0xff]
    %s1178 = scalar_lea.vmem %s13, 6
    %v1179 = vld [vmem:[%s1178] sm:$0x3]
    %v1181 = vperm.slane %v1179, 0
    %v1182 = vperm.slane %v1179, 1
    %v1186 = vsel %vm155, %v1128, 0
    %1188 = vmatpush.msra.mxu0 %v1160
    %1189 = vmatpush.msra.mxu0 %v1158
    %1190 = vmatpush.msra.mxu0 %v1156
    %1191 = vmatpush.msra.mxu0 %v1154
    %1192 = vmatpush.msra.mxu0 %v1152
    %1193 = vmatpush.msra.mxu0 %v1150
    %1194 = vmatpush.msra.mxu0 %v1148
    %1195 = vmatpush.msra.mxu0 %v1146
    %1196 = vmatpush.msra.mxu0 %v1144
    %1197 = vmatpush.msra.mxu0 %v1142
    %1198 = vmatpush.msra.mxu0 %v1140
    %1199 = vmatpush.msra.mxu0 %v1138
    %1200 = vmatpush.msra.mxu0 %v1136
    %1201 = vmatpush.msra.mxu0 %v1134
    %1202 = vmatpush.msra.mxu0 %v1132
    %1203 = vmatpush.msra.mxu0 %v1130
    %1204 = vmatmul.f32.gmra.mxu0 %v1127
    %v1205 = vpop.f32.mrf.mxu0
    %v1206 = vadd.f32 %v1181, %v1205
    %1207 = vdwg.mxu0
    %1208 = vmatpush.msra.mxu0 0.0
    %1209 = vmatpush.msra.mxu0 0.0
    %1210 = vmatpush.msra.mxu0 0.0
    %1211 = vmatpush.msra.mxu0 0.0
    %1212 = vmatpush.msra.mxu0 0.0
    %1213 = vmatpush.msra.mxu0 0.0
    %1214 = vmatpush.msra.mxu0 0.0
    %1215 = vmatpush.msra.mxu0 0.0
    %1216 = vmatpush.msra.mxu0 %v1176
    %1217 = vmatpush.msra.mxu0 %v1174
    %1218 = vmatpush.msra.mxu0 %v1172
    %1219 = vmatpush.msra.mxu0 %v1170
    %1220 = vmatpush.msra.mxu0 %v1168
    %1221 = vmatpush.msra.mxu0 %v1166
    %1222 = vmatpush.msra.mxu0 %v1164
    %1223 = vmatpush.msra.mxu0 %v1162
    %1224 = vmatmul.f32.gmra.mxu0 %v1186
    %v1225 = vpop.f32.mrf.mxu0
    %v1226 = vadd.f32 %v1206, %v1225
    %1227 = vdwg.mxu0
    %1228 = vmatpush.msra.mxu0 %v1161
    %1229 = vmatpush.msra.mxu0 %v1159
    %1230 = vmatpush.msra.mxu0 %v1157
    %1231 = vmatpush.msra.mxu0 %v1155
    %1232 = vmatpush.msra.mxu0 %v1153
    %1233 = vmatpush.msra.mxu0 %v1151
    %1234 = vmatpush.msra.mxu0 %v1149
    %1235 = vmatpush.msra.mxu0 %v1147
    %1236 = vmatpush.msra.mxu0 %v1145
    %1237 = vmatpush.msra.mxu0 %v1143
    %1238 = vmatpush.msra.mxu0 %v1141
    %1239 = vmatpush.msra.mxu0 %v1139
    %1240 = vmatpush.msra.mxu0 %v1137
    %1241 = vmatpush.msra.mxu0 %v1135
    %1242 = vmatpush.msra.mxu0 %v1133
    %1243 = vmatpush.msra.mxu0 %v1131
    %1244 = vmatmul.f32.gmra.mxu0 %v1127
    %v1245 = vpop.f32.mrf.mxu0
    %v1246 = vadd.f32 %v1182, %v1245
    %1247 = vdwg.mxu0
    %1248 = vmatpush.msra.mxu0 0.0
    %1249 = vmatpush.msra.mxu0 0.0
    %1250 = vmatpush.msra.mxu0 0.0
    %1251 = vmatpush.msra.mxu0 0.0
    %1252 = vmatpush.msra.mxu0 0.0
    %1253 = vmatpush.msra.mxu0 0.0
    %1254 = vmatpush.msra.mxu0 0.0
    %1255 = vmatpush.msra.mxu0 0.0
    %1256 = vmatpush.msra.mxu0 %v1177
    %1257 = vmatpush.msra.mxu0 %v1175
    %1258 = vmatpush.msra.mxu0 %v1173
    %1259 = vmatpush.msra.mxu0 %v1171
    %1260 = vmatpush.msra.mxu0 %v1169
    %1261 = vmatpush.msra.mxu0 %v1167
    %1262 = vmatpush.msra.mxu0 %v1165
    %1263 = vmatpush.msra.mxu0 %v1163
    %1264 = vmatmul.f32.gmra.mxu0 %v1186
    %v1265 = vpop.f32.mrf.mxu0
    %v1266 = vadd.f32 %v1246, %v1265
    %1267 = vdwg.mxu0
    %vm1268 = vcmp.gt.f32.partialorder %v1226, 0.0
    %vm1269 = vcmp.gt.f32.partialorder %v1266, 0.0
    %v1270 = vmul.f32 %v1226, 0.01
    %v1271 = vmul.f32 %v1266, 0.01
    %v1272 = vsel %vm1268, %v1226, %v1270
    %v1273 = vsel %vm1269, %v1266, %v1271
    %s1274 = scalar_lea.vmem [#allocation3], 1536
    %v1275 = vld [vmem:[%s1274] sm:$0xff]
    %v1276 = vld [vmem:[%s1274 + $0x8] sm:$0xff]
    %v1277 = vld [vmem:[%s1274 + $0x10] sm:$0xff]
    %v1278 = vld [vmem:[%s1274 + $0x18] sm:$0xff]
    %v1279 = vld [vmem:[%s1274 + $0x20] sm:$0xff]
    %v1280 = vld [vmem:[%s1274 + $0x28] sm:$0xff]
    %v1281 = vld [vmem:[%s1274 + $0x30] sm:$0xff]
    %v1282 = vld [vmem:[%s1274 + $0x38] sm:$0xff]
    %v1283 = vld [vmem:[%s1274 + $0x40] sm:$0xff]
    %v1284 = vld [vmem:[%s1274 + $0x48] sm:$0xff]
    %v1285 = vld [vmem:[%s1274 + $0x50] sm:$0xff]
    %v1286 = vld [vmem:[%s1274 + $0x58] sm:$0xff]
    %v1287 = vld [vmem:[%s1274 + $0x60] sm:$0xff]
    %v1288 = vld [vmem:[%s1274 + $0x68] sm:$0xff]
    %v1289 = vld [vmem:[%s1274 + $0x70] sm:$0xff]
    %v1290 = vld [vmem:[%s1274 + $0x78] sm:$0xff]
    %v1291 = vld [vmem:[%s1274 + $0x80] sm:$0xff]
    %v1292 = vld [vmem:[%s1274 + $0x88] sm:$0xff]
    %v1293 = vld [vmem:[%s1274 + $0x90] sm:$0xff]
    %v1294 = vld [vmem:[%s1274 + $0x98] sm:$0xff]
    %v1295 = vld [vmem:[%s1274 + $0xa0] sm:$0xff]
    %v1296 = vld [vmem:[%s1274 + $0xa8] sm:$0xff]
    %v1297 = vld [vmem:[%s1274 + $0xb0] sm:$0xff]
    %v1298 = vld [vmem:[%s1274 + $0xb8] sm:$0xff]
    %v1299 = vld [vmem:[%s1274 + $0xc0] sm:$0xff]
    %v1300 = vld [vmem:[%s1274 + $0xc8] sm:$0xff]
    %v1301 = vld [vmem:[%s1274 + $0xd0] sm:$0xff]
    %v1302 = vld [vmem:[%s1274 + $0xd8] sm:$0xff]
    %v1303 = vld [vmem:[%s1274 + $0xe0] sm:$0xff]
    %v1304 = vld [vmem:[%s1274 + $0xe8] sm:$0xff]
    %v1305 = vld [vmem:[%s1274 + $0xf0] sm:$0xff]
    %v1306 = vld [vmem:[%s1274 + $0xf8] sm:$0xff]
    %v1307 = vld [vmem:[%s1274 + $0x100] sm:$0xff]
    %v1308 = vld [vmem:[%s1274 + $0x108] sm:$0xff]
    %v1309 = vld [vmem:[%s1274 + $0x110] sm:$0xff]
    %v1310 = vld [vmem:[%s1274 + $0x118] sm:$0xff]
    %v1311 = vld [vmem:[%s1274 + $0x120] sm:$0xff]
    %v1312 = vld [vmem:[%s1274 + $0x128] sm:$0xff]
    %v1313 = vld [vmem:[%s1274 + $0x130] sm:$0xff]
    %v1314 = vld [vmem:[%s1274 + $0x138] sm:$0xff]
    %v1315 = vld [vmem:[%s1274 + $0x140] sm:$0xff]
    %v1316 = vld [vmem:[%s1274 + $0x148] sm:$0xff]
    %v1317 = vld [vmem:[%s1274 + $0x150] sm:$0xff]
    %v1318 = vld [vmem:[%s1274 + $0x158] sm:$0xff]
    %v1319 = vld [vmem:[%s1274 + $0x160] sm:$0xff]
    %v1320 = vld [vmem:[%s1274 + $0x168] sm:$0xff]
    %v1321 = vld [vmem:[%s1274 + $0x170] sm:$0xff]
    %v1322 = vld [vmem:[%s1274 + $0x178] sm:$0xff]
    %s1323 = scalar_lea.vmem %s13, 8
    %v1324 = vld [vmem:[%s1323] sm:$0x3]
    %v1326 = vperm.slane %v1324, 0
    %v1327 = vperm.slane %v1324, 1
    %v1331 = vsel %vm155, %v1273, 0
    %1333 = vmatpush.msra.mxu0 %v1305
    %1334 = vmatpush.msra.mxu0 %v1303
    %1335 = vmatpush.msra.mxu0 %v1301
    %1336 = vmatpush.msra.mxu0 %v1299
    %1337 = vmatpush.msra.mxu0 %v1297
    %1338 = vmatpush.msra.mxu0 %v1295
    %1339 = vmatpush.msra.mxu0 %v1293
    %1340 = vmatpush.msra.mxu0 %v1291
    %1341 = vmatpush.msra.mxu0 %v1289
    %1342 = vmatpush.msra.mxu0 %v1287
    %1343 = vmatpush.msra.mxu0 %v1285
    %1344 = vmatpush.msra.mxu0 %v1283
    %1345 = vmatpush.msra.mxu0 %v1281
    %1346 = vmatpush.msra.mxu0 %v1279
    %1347 = vmatpush.msra.mxu0 %v1277
    %1348 = vmatpush.msra.mxu0 %v1275
    %1349 = vmatmul.f32.gmra.mxu0 %v1272
    %v1350 = vpop.f32.mrf.mxu0
    %v1351 = vadd.f32 %v1326, %v1350
    %1352 = vdwg.mxu0
    %1353 = vmatpush.msra.mxu0 0.0
    %1354 = vmatpush.msra.mxu0 0.0
    %1355 = vmatpush.msra.mxu0 0.0
    %1356 = vmatpush.msra.mxu0 0.0
    %1357 = vmatpush.msra.mxu0 0.0
    %1358 = vmatpush.msra.mxu0 0.0
    %1359 = vmatpush.msra.mxu0 0.0
    %1360 = vmatpush.msra.mxu0 0.0
    %1361 = vmatpush.msra.mxu0 %v1321
    %1362 = vmatpush.msra.mxu0 %v1319
    %1363 = vmatpush.msra.mxu0 %v1317
    %1364 = vmatpush.msra.mxu0 %v1315
    %1365 = vmatpush.msra.mxu0 %v1313
    %1366 = vmatpush.msra.mxu0 %v1311
    %1367 = vmatpush.msra.mxu0 %v1309
    %1368 = vmatpush.msra.mxu0 %v1307
    %1369 = vmatmul.f32.gmra.mxu0 %v1331
    %v1370 = vpop.f32.mrf.mxu0
    %v1371 = vadd.f32 %v1351, %v1370
    %1372 = vdwg.mxu0
    %1373 = vmatpush.msra.mxu0 %v1306
    %1374 = vmatpush.msra.mxu0 %v1304
    %1375 = vmatpush.msra.mxu0 %v1302
    %1376 = vmatpush.msra.mxu0 %v1300
    %1377 = vmatpush.msra.mxu0 %v1298
    %1378 = vmatpush.msra.mxu0 %v1296
    %1379 = vmatpush.msra.mxu0 %v1294
    %1380 = vmatpush.msra.mxu0 %v1292
    %1381 = vmatpush.msra.mxu0 %v1290
    %1382 = vmatpush.msra.mxu0 %v1288
    %1383 = vmatpush.msra.mxu0 %v1286
    %1384 = vmatpush.msra.mxu0 %v1284
    %1385 = vmatpush.msra.mxu0 %v1282
    %1386 = vmatpush.msra.mxu0 %v1280
    %1387 = vmatpush.msra.mxu0 %v1278
    %1388 = vmatpush.msra.mxu0 %v1276
    %1389 = vmatmul.f32.gmra.mxu0 %v1272
    %v1390 = vpop.f32.mrf.mxu0
    %v1391 = vadd.f32 %v1327, %v1390
    %1392 = vdwg.mxu0
    %1393 = vmatpush.msra.mxu0 0.0
    %1394 = vmatpush.msra.mxu0 0.0
    %1395 = vmatpush.msra.mxu0 0.0
    %1396 = vmatpush.msra.mxu0 0.0
    %1397 = vmatpush.msra.mxu0 0.0
    %1398 = vmatpush.msra.mxu0 0.0
    %1399 = vmatpush.msra.mxu0 0.0
    %1400 = vmatpush.msra.mxu0 0.0
    %1401 = vmatpush.msra.mxu0 %v1322
    %1402 = vmatpush.msra.mxu0 %v1320
    %1403 = vmatpush.msra.mxu0 %v1318
    %1404 = vmatpush.msra.mxu0 %v1316
    %1405 = vmatpush.msra.mxu0 %v1314
    %1406 = vmatpush.msra.mxu0 %v1312
    %1407 = vmatpush.msra.mxu0 %v1310
    %1408 = vmatpush.msra.mxu0 %v1308
    %1409 = vmatmul.f32.gmra.mxu0 %v1331
    %v1410 = vpop.f32.mrf.mxu0
    %v1411 = vadd.f32 %v1391, %v1410
    %1412 = vdwg.mxu0
    %vm1413 = vcmp.gt.f32.partialorder %v1371, 0.0
    %vm1414 = vcmp.gt.f32.partialorder %v1411, 0.0
    %v1415 = vmul.f32 %v1371, 0.01
    %v1416 = vmul.f32 %v1411, 0.01
    %v1417 = vsel %vm1413, %v1371, %v1415
    %v1418 = vsel %vm1414, %v1411, %v1416
    %v1419 = vld [vmem:[%s14] sm:$0xff]
    %v1420 = vld [vmem:[%s14 + $0x8] sm:$0xff]
    %v1421 = vld [vmem:[%s14 + $0x10] sm:$0xff]
    %v1422 = vld [vmem:[%s14 + $0x18] sm:$0xff]
    %v1423 = vld [vmem:[%s14 + $0x20] sm:$0xff]
    %v1424 = vld [vmem:[%s14 + $0x28] sm:$0xff]
    %v1425 = vld [vmem:[%s14 + $0x30] sm:$0xff]
    %v1426 = vld [vmem:[%s14 + $0x38] sm:$0xff]
    %v1427 = vld [vmem:[%s14 + $0x40] sm:$0xff]
    %v1428 = vld [vmem:[%s14 + $0x48] sm:$0xff]
    %v1429 = vld [vmem:[%s14 + $0x50] sm:$0xff]
    %v1430 = vld [vmem:[%s14 + $0x58] sm:$0xff]
    %v1431 = vld [vmem:[%s14 + $0x60] sm:$0xff]
    %v1432 = vld [vmem:[%s14 + $0x68] sm:$0xff]
    %v1433 = vld [vmem:[%s14 + $0x70] sm:$0xff]
    %v1434 = vld [vmem:[%s14 + $0x78] sm:$0xff]
    %v1435 = vld [vmem:[%s14 + $0x80] sm:$0xff]
    %v1436 = vld [vmem:[%s14 + $0x88] sm:$0xff]
    %v1437 = vld [vmem:[%s14 + $0x90] sm:$0xff]
    %v1438 = vld [vmem:[%s14 + $0x98] sm:$0xff]
    %v1439 = vld [vmem:[%s14 + $0xa0] sm:$0xff]
    %v1440 = vld [vmem:[%s14 + $0xa8] sm:$0xff]
    %v1441 = vld [vmem:[%s14 + $0xb0] sm:$0xff]
    %v1442 = vld [vmem:[%s14 + $0xb8] sm:$0xff]
    %v1443 = vld [vmem:[#allocation2] sm:$0x1]
    %v1445 = vperm.slane %v1443, 0
    %v1448 = vsel %vm155, %v1418, 0
    %1450 = vmatpush.msra.mxu0 %v1434
    %1451 = vmatpush.msra.mxu0 %v1433
    %1452 = vmatpush.msra.mxu0 %v1432
    %1453 = vmatpush.msra.mxu0 %v1431
    %1454 = vmatpush.msra.mxu0 %v1430
    %1455 = vmatpush.msra.mxu0 %v1429
    %1456 = vmatpush.msra.mxu0 %v1428
    %1457 = vmatpush.msra.mxu0 %v1427
    %1458 = vmatpush.msra.mxu0 %v1426
    %1459 = vmatpush.msra.mxu0 %v1425
    %1460 = vmatpush.msra.mxu0 %v1424
    %1461 = vmatpush.msra.mxu0 %v1423
    %1462 = vmatpush.msra.mxu0 %v1422
    %1463 = vmatpush.msra.mxu0 %v1421
    %1464 = vmatpush.msra.mxu0 %v1420
    %1465 = vmatpush.msra.mxu0 %v1419
    %1466 = vmatmul.f32.gmra.mxu0 %v1417
    %v1467 = vpop.f32.mrf.mxu0
    %v1468 = vadd.f32 %v1445, %v1467
    %1469 = vdwg.mxu0
    %1470 = vmatpush.msra.mxu0 0.0
    %1471 = vmatpush.msra.mxu0 0.0
    %1472 = vmatpush.msra.mxu0 0.0
    %1473 = vmatpush.msra.mxu0 0.0
    %1474 = vmatpush.msra.mxu0 0.0
    %1475 = vmatpush.msra.mxu0 0.0
    %1476 = vmatpush.msra.mxu0 0.0
    %1477 = vmatpush.msra.mxu0 0.0
    %1478 = vmatpush.msra.mxu0 %v1442
    %1479 = vmatpush.msra.mxu0 %v1441
    %1480 = vmatpush.msra.mxu0 %v1440
    %1481 = vmatpush.msra.mxu0 %v1439
    %1482 = vmatpush.msra.mxu0 %v1438
    %1483 = vmatpush.msra.mxu0 %v1437
    %1484 = vmatpush.msra.mxu0 %v1436
    %1485 = vmatpush.msra.mxu0 %v1435
    %1486 = vmatmul.f32.gmra.mxu0 %v1448
    %v1487 = vpop.f32.mrf.mxu0
    %v1488 = vadd.f32 %v1468, %v1487
    %1489 = vdwg.mxu0
    %vm1490 = vcmask 1024
    %1491 = vst.msk [vmem:[%s16] sm:$0x3] %vm1490, %v1488
    // Predicated region
    $region70: #{tpu_custom_call.1} parent=1 // pred_check
      _
    $region71: #{tpu_custom_call.1} parent=1 // pred_check_branch
      %1493 = sbr.rel (0) target = $region73
    $region72: #{tpu_custom_call.1} parent=1 // pred_region
      _
    $region73: #{tpu_custom_call.1} parent=1 // pred_fallthru
      _
    // Predicated region
    $region74: #{tpu_custom_call.1} parent=1 // pred_check
      _
    $region75: #{tpu_custom_call.1} parent=1 // pred_check_branch
      %1495 = sbr.rel (0) target = $region77
    $region76: #{tpu_custom_call.1} parent=1 // pred_region
      _
    $region77: #{tpu_custom_call.1} parent=1 // pred_fallthru
      _
    %1496 = vsyncpa [#allocation4], 1

</llo_original>
